<compile_context>
chip_gen: v5e
topology: v5e:2x2
jax: 0.10.0
libtpu: 0.0.40
codegen_flags: <defaults>
</compile_context>

<pallas_src>
import functools
import math

import jax
import jax.numpy as jnp
from jax.experimental import pallas as pl
from jax.experimental.pallas import tpu as pltpu

BN_EPS = 1e-5
LN_EPS = 1e-5

_PARALLEL_1D = pltpu.CompilerParams(dimension_semantics=("parallel",))


# ---------------------------------------------------------------------------
# Buffers / parameters
# ---------------------------------------------------------------------------
def make_positional_encoding(d_model: int, max_len: int = 5000) -> jnp.ndarray:
    position = jnp.arange(max_len, dtype=jnp.float32)[:, None]
    div_term = jnp.exp(
        jnp.arange(0, d_model, 2, dtype=jnp.float32) * (-math.log(10000.0) / d_model)
    )
    pe = jnp.zeros((max_len, 1, d_model), dtype=jnp.float32)
    pe = pe.at[:, 0, 0::2].set(jnp.sin(position * div_term))
    pe = pe.at[:, 0, 1::2].set(jnp.cos(position * div_term))
    return pe


def _row_tile(m: int, max_rows: int = 512) -> int:
    # Largest token-row tile that keeps (weights + activations + double
    # buffering) comfortably inside scoped VMEM on v5e/v6e/v7x.  When the tile
    # does not cover the whole axis it is a multiple of 8 (sublane constraint).
    return m if m <= max_rows else max_rows


# ---------------------------------------------------------------------------
# Kernels
# ---------------------------------------------------------------------------
def _layernorm(z, g, b, eps):
    mu = jnp.mean(z, axis=-1, keepdims=True)
    zc = z - mu
    var = jnp.mean(zc * zc, axis=-1, keepdims=True)
    return zc * jax.lax.rsqrt(var + eps) * g + b


def _embed_pe_kernel(x_ref, scale_ref, shift_ref, we_ref, be_ref, pe_ref, o_ref):
    # One batch element per grid step.
    x = x_ref[0].astype(jnp.float32)                       # (T, D_obs)
    xn = x * scale_ref[...] + shift_ref[...]               # folded BatchNorm1d (eval)
    y = jnp.dot(xn, we_ref[...], preferred_element_type=jnp.float32)
    y = y + be_ref[...] + pe_ref[0]                        # bias + pe[batch] (bcast over T)
    o_ref[0] = y.astype(o_ref.dtype)


def _linear_kernel(x_ref, w_ref, b_ref, o_ref, *, activation):
    y = jnp.dot(x_ref[...], w_ref[...], preferred_element_type=jnp.float32)
    y = y + b_ref[...]
    if activation == "relu":
        y = jnp.maximum(y, 0.0)
    o_ref[...] = y.astype(o_ref.dtype)


def _attention_kernel(q_ref, k_ref, v_ref, o_ref, *, scale):
    # One (batch, head) pair per grid step.
    q = q_ref[0].astype(jnp.float32)                       # (T, Hd)
    k = k_ref[0].astype(jnp.float32)
    v = v_ref[0].astype(jnp.float32)
    s = jax.lax.dot_general(q, k, (((1,), (1,)), ((), ())),
                            preferred_element_type=jnp.float32) * scale
    s = s - jnp.max(s, axis=-1, keepdims=True)
    p = jnp.exp(s)
    p = p / jnp.sum(p, axis=-1, keepdims=True)
    o_ref[0] = jnp.dot(p, v, preferred_element_type=jnp.float32).astype(o_ref.dtype)


def _attn_out_ln_kernel(x_ref, a_ref, wo_ref, bo_ref, g_ref, b_ref, o_ref, *, eps):
    a = jnp.dot(a_ref[...], wo_ref[...], preferred_element_type=jnp.float32)
    a = a + bo_ref[...]
    z = x_ref[...].astype(jnp.float32) + a
    o_ref[...] = _layernorm(z, g_ref[...], b_ref[...], eps).astype(o_ref.dtype)


def _ffn_ln_kernel(x_ref, w1_ref, b1_ref, w2_ref, b2_ref, g_ref, b_ref, o_ref, *, eps):
    x = x_ref[...].astype(jnp.float32)
    h = jnp.dot(x, w1_ref[...], preferred_element_type=jnp.float32) + b1_ref[...]
    h = jnp.maximum(h, 0.0)
    y = jnp.dot(h, w2_ref[...], preferred_element_type=jnp.float32) + b2_ref[...]
    o_ref[...] = _layernorm(x + y, g_ref[...], b_ref[...], eps).astype(o_ref.dtype)


# ---------------------------------------------------------------------------
# pallas_call wrappers
# ---------------------------------------------------------------------------
def pallas_embed_pe(x, bn_scale, bn_shift, we, be, pe_b):
    B, T, D = x.shape
    E = we.shape[1]
    return pl.pallas_call(
        _embed_pe_kernel,
        out_shape=jax.ShapeDtypeStruct((B, T, E), x.dtype),
        grid=(B,),
        in_specs=[
            pl.BlockSpec((1, T, D), lambda b: (b, 0, 0)),
            pl.BlockSpec((1, D), lambda b: (0, 0)),
            pl.BlockSpec((1, D), lambda b: (0, 0)),
            pl.BlockSpec((D, E), lambda b: (0, 0)),
            pl.BlockSpec((1, E), lambda b: (0, 0)),
            pl.BlockSpec((1, 1, E), lambda b: (b, 0, 0)),
        ],
        out_specs=pl.BlockSpec((1, T, E), lambda b: (b, 0, 0)),
        compiler_params=_PARALLEL_1D,
    )(x, bn_scale.reshape(1, D), bn_shift.reshape(1, D), we, be.reshape(1, E), pe_b)


def pallas_linear(x, w, b, *, activation=None):
    M, K = x.shape
    N = w.shape[1]
    TM = _row_tile(M)
    kernel = functools.partial(_linear_kernel, activation=activation)
    return pl.pallas_call(
        kernel,
        out_shape=jax.ShapeDtypeStruct((M, N), x.dtype),
        grid=(pl.cdiv(M, TM),),
        in_specs=[
            pl.BlockSpec((TM, K), lambda i: (i, 0)),
            pl.BlockSpec((K, N), lambda i: (0, 0)),
            pl.BlockSpec((1, N), lambda i: (0, 0)),
        ],
        out_specs=pl.BlockSpec((TM, N), lambda i: (i, 0)),
        compiler_params=_PARALLEL_1D,
    )(x, w, b.reshape(1, N))


def pallas_attention(q, k, v, *, scale):
    BH, T, Hd = q.shape
    kernel = functools.partial(_attention_kernel, scale=scale)
    spec = pl.BlockSpec((1, T, Hd), lambda i: (i, 0, 0))
    return pl.pallas_call(
        kernel,
        out_shape=jax.ShapeDtypeStruct((BH, T, Hd), q.dtype),
        grid=(BH,),
        in_specs=[spec, spec, spec],
        out_specs=spec,
        compiler_params=_PARALLEL_1D,
    )(q, k, v)


def pallas_attn_out_ln(x, a, wo, bo, g, b):
    M, E = x.shape
    TM = _row_tile(M)
    kernel = functools.partial(_attn_out_ln_kernel, eps=LN_EPS)
    return pl.pallas_call(
        kernel,
        out_shape=jax.ShapeDtypeStruct((M, E), x.dtype),
        grid=(pl.cdiv(M, TM),),
        in_specs=[
            pl.BlockSpec((TM, E), lambda i: (i, 0)),   # residual x
            pl.BlockSpec((TM, E), lambda i: (i, 0)),   # merged attention heads
            pl.BlockSpec((E, E), lambda i: (0, 0)),
            pl.BlockSpec((1, E), lambda i: (0, 0)),
            pl.BlockSpec((1, E), lambda i: (0, 0)),
            pl.BlockSpec((1, E), lambda i: (0, 0)),
        ],
        out_specs=pl.BlockSpec((TM, E), lambda i: (i, 0)),
        input_output_aliases={0: 0},
        compiler_params=_PARALLEL_1D,
    )(x, a, wo, bo.reshape(1, E), g.reshape(1, E), b.reshape(1, E))


def pallas_ffn_ln(x, w1, b1, w2, b2, g, b):
    M, E = x.shape
    F = w1.shape[1]
    TM = _row_tile(M)
    kernel = functools.partial(_ffn_ln_kernel, eps=LN_EPS)
    return pl.pallas_call(
        kernel,
        out_shape=jax.ShapeDtypeStruct((M, E), x.dtype),
        grid=(pl.cdiv(M, TM),),
        in_specs=[
            pl.BlockSpec((TM, E), lambda i: (i, 0)),   # residual x
            pl.BlockSpec((E, F), lambda i: (0, 0)),
            pl.BlockSpec((1, F), lambda i: (0, 0)),
            pl.BlockSpec((F, E), lambda i: (0, 0)),
            pl.BlockSpec((1, E), lambda i: (0, 0)),
            pl.BlockSpec((1, E), lambda i: (0, 0)),
            pl.BlockSpec((1, E), lambda i: (0, 0)),
        ],
        out_specs=pl.BlockSpec((TM, E), lambda i: (i, 0)),
        input_output_aliases={0: 0},
        compiler_params=_PARALLEL_1D,
    )(x, w1, b1.reshape(1, F), w2, b2.reshape(1, E), g.reshape(1, E), b.reshape(1, E))


# ---------------------------------------------------------------------------
# Full forward pass
# ---------------------------------------------------------------------------
def transformer_prediction_forward(X, params, heads):
    B, T, _ = X.shape
    E = params["we"].shape[1]
    Hd = E // heads

    # BatchNorm1d (inference): the permute(0,2,1) pair cancels — it is a
    # per-observed-channel affine on the last axis; fold into scale/shift.
    bn_scale = params["bn_gamma"] * jax.lax.rsqrt(params["bn_var"] + BN_EPS)
    bn_shift = params["bn_beta"] - params["bn_mean"] * bn_scale
    pe_b = params["pe"][:B]                       # module indexes pe by batch axis

    x = pallas_embed_pe(X, bn_scale, bn_shift, params["we"], params["be"], pe_b)
    x = x.reshape(B * T, E)                       # lane-dense (tokens, features) slab

    for layer in params["layers"]:
        qkv = pallas_linear(x, layer["w_in"], layer["b_in"])          # (M, 3E)
        qkv = qkv.reshape(B, T, 3 * E)
        q, k, v = jnp.split(qkv, 3, axis=-1)

        def split_heads(t):
            return t.reshape(B, T, heads, Hd).transpose(0, 2, 1, 3).reshape(B * heads, T, Hd)

        a = pallas_attention(split_heads(q), split_heads(k), split_heads(v),
                             scale=1.0 / math.sqrt(Hd))
        a = a.reshape(B, heads, T, Hd).transpose(0, 2, 1, 3).reshape(B * T, E)

        x = pallas_attn_out_ln(x, a, layer["wo"], layer["bo"],
                               layer["ln1_g"], layer["ln1_b"])
        x = pallas_ffn_ln(x, layer["w1"], layer["b1"], layer["w2"], layer["b2"],
                          layer["ln2_g"], layer["ln2_b"])

    z = pallas_linear(x, params["wd"], params["bd"])
    return z.reshape(B, T, -1)


# ---------------------------------------------------------------------------
# Pure-JAX reference (same math, highest matmul precision) for self-check
# ---------------------------------------------------------------------------
def _ref_ln(z, g, b):
    mu = z.mean(-1, keepdims=True)
    var = ((z - mu) ** 2).mean(-1, keepdims=True)
    return (z - mu) / jnp.sqrt(var + LN_EPS) * g + b


def _ref_forward(X, params, heads):
    hp = jax.lax.Precision.HIGHEST
    B, T, _ = X.shape
    E = params["we"].shape[1]
    Hd = E // heads
    scale = params["bn_gamma"] / jnp.sqrt(params["bn_var"] + BN_EPS)
    shift = params["bn_beta"] - params["bn_mean"] * scale
    x = X * scale + shift
    x = jnp.einsum("btd,de->bte", x, params["we"], precision=hp) + params["be"]
    x = x + params["pe"][:B]
    for layer in params["layers"]:
        qkv = jnp.einsum("bte,ef->btf", x, layer["w_in"], precision=hp) + layer["b_in"]
        q, k, v = jnp.split(qkv, 3, axis=-1)
        sh = lambda t: t.reshape(B, T, heads, Hd).transpose(0, 2, 1, 3)
        q, k, v = sh(q), sh(k), sh(v)
        s = jnp.einsum("bhqd,bhkd->bhqk", q, k, precision=hp) / math.sqrt(Hd)
        p = jax.nn.softmax(s, axis=-1)
        a = jnp.einsum("bhqk,bhkd->bhqd", p, v, precision=hp)
        a = a.transpose(0, 2, 1, 3).reshape(B, T, E)
        a = jnp.einsum("bte,ef->btf", a, layer["wo"], precision=hp) + layer["bo"]
        x = _ref_ln(x + a, layer["ln1_g"], layer["ln1_b"])
        h = jax.nn.relu(jnp.einsum("bte,ef->btf", x, layer["w1"], precision=hp) + layer["b1"])
        y = jnp.einsum("btf,fe->bte", h, layer["w2"], precision=hp) + layer["b2"]
        x = _ref_ln(x + y, layer["ln2_g"], layer["ln2_b"])
    return jnp.einsum("bte,el->btl", x, params["wd"], precision=hp) + params["bd"]


# ---------------------------------------------------------------------------
# Demo / self-check
# ---------------------------------------------------------------------------
if __name__ == "__main__":
    B, T = 2, 8
    OBSERVED, LATENT = 4, 3
    EMBED, HEADS, LAYERS, FFN = 16, 8, 2, 1000

    keys = iter(jax.random.split(jax.random.PRNGKey(0), 64))

    def nrm(shape, scale=1.0):
        return scale * jax.random.normal(next(keys), shape, dtype=jnp.float32)

    params = {
        "bn_gamma": 1.0 + 0.1 * nrm((OBSERVED,)),
        "bn_beta": 0.1 * nrm((OBSERVED,)),
        "bn_mean": 0.1 * nrm((OBSERVED,)),
        "bn_var": 1.0 + 0.1 * jnp.abs(nrm((OBSERVED,))),
        "we": nrm((OBSERVED, EMBED), 1.0 / math.sqrt(OBSERVED)),
        "be": 0.1 * nrm((EMBED,)),
        "pe": make_positional_encoding(EMBED, max_len=5000),
        "wd": nrm((EMBED, LATENT), 1.0 / math.sqrt(EMBED)),
        "bd": 0.1 * nrm((LATENT,)),
        "layers": [],
    }
    for _ in range(LAYERS):
        params["layers"].append({
            "w_in": nrm((EMBED, 3 * EMBED), 1.0 / math.sqrt(EMBED)),
            "b_in": 0.1 * nrm((3 * EMBED,)),
            "wo": nrm((EMBED, EMBED), 1.0 / math.sqrt(EMBED)),
            "bo": 0.1 * nrm((EMBED,)),
            "ln1_g": 1.0 + 0.1 * nrm((EMBED,)),
            "ln1_b": 0.1 * nrm((EMBED,)),
            "w1": nrm((EMBED, FFN), 1.0 / math.sqrt(EMBED)),
            "b1": 0.1 * nrm((FFN,)),
            "w2": nrm((FFN, EMBED), 1.0 / math.sqrt(FFN)),
            "b2": 0.1 * nrm((EMBED,)),
            "ln2_g": 1.0 + 0.1 * nrm((EMBED,)),
            "ln2_b": 0.1 * nrm((EMBED,)),
        })

    X = jax.random.normal(next(keys), (B, T, OBSERVED), dtype=jnp.float32)

    fwd = jax.jit(transformer_prediction_forward, static_argnums=2)
    out = jax.block_until_ready(fwd(X, params, HEADS))
    assert out.shape == (B, T, LATENT)

    ref = _ref_forward(X, params, HEADS)
    err = float(jnp.max(jnp.abs(out - ref)))
    assert err < 2e-3, f"max abs error vs reference = {err}"

    print("KERNEL_OK")
</pallas_src>

<mosaic_0001>
module attributes {stable_mosaic.version = 11 : i64} {
  func.func @_embed_pe_kernel(%arg0: i32, %arg1: memref<1x8x4xf32, #tpu.memory_space<vmem>>, %arg2: memref<1x4xf32, #tpu.memory_space<vmem>>, %arg3: memref<1x4xf32, #tpu.memory_space<vmem>>, %arg4: memref<4x16xf32, #tpu.memory_space<vmem>>, %arg5: memref<1x16xf32, #tpu.memory_space<vmem>>, %arg6: memref<1x1x16xf32, #tpu.memory_space<vmem>>, %arg7: memref<1x8x16xf32, #tpu.memory_space<vmem>>) attributes {dimension_semantics = [#tpu.dimension_semantics<parallel>], iteration_bounds = array<i64: 2>, scalar_prefetch = 0 : i64, scratch_operands = 0 : i64, tpu.core_type = #tpu.core_type<tc>, window_params = [{transform_indices = @transform_0, window_bounds = array<i64: 1, 8, 4>}, {pipeline_mode = #tpu.pipeline_mode<synchronous>, transform_indices = @transform_1, window_bounds = array<i64: 1, 4>}, {pipeline_mode = #tpu.pipeline_mode<synchronous>, transform_indices = @transform_2, window_bounds = array<i64: 1, 4>}, {pipeline_mode = #tpu.pipeline_mode<synchronous>, transform_indices = @transform_3, window_bounds = array<i64: 4, 16>}, {pipeline_mode = #tpu.pipeline_mode<synchronous>, transform_indices = @transform_4, window_bounds = array<i64: 1, 16>}, {transform_indices = @transform_5, window_bounds = array<i64: 1, 1, 16>}, {transform_indices = @transform_6, window_bounds = array<i64: 1, 8, 16>}]} {
    %c0 = arith.constant 0 : index
    %c0_0 = arith.constant 0 : index
    %c0_1 = arith.constant 0 : index
    %0 = vector.load %arg1[%c0, %c0_0, %c0_1] : memref<1x8x4xf32, #tpu.memory_space<vmem>>, vector<1x8x4xf32>
    %1 = vector.shape_cast %0 : vector<1x8x4xf32> to vector<8x4xf32>
    %c0_2 = arith.constant 0 : index
    %c0_3 = arith.constant 0 : index
    %2 = vector.load %arg2[%c0_2, %c0_3] : memref<1x4xf32, #tpu.memory_space<vmem>>, vector<1x4xf32>
    %3 = vector.broadcast %2 : vector<1x4xf32> to vector<8x4xf32>
    %4 = arith.mulf %1, %3 : vector<8x4xf32>
    %c0_4 = arith.constant 0 : index
    %c0_5 = arith.constant 0 : index
    %5 = vector.load %arg3[%c0_4, %c0_5] : memref<1x4xf32, #tpu.memory_space<vmem>>, vector<1x4xf32>
    %6 = vector.broadcast %5 : vector<1x4xf32> to vector<8x4xf32>
    %7 = arith.addf %4, %6 : vector<8x4xf32>
    %c0_6 = arith.constant 0 : index
    %c0_7 = arith.constant 0 : index
    %8 = vector.load %arg4[%c0_6, %c0_7] : memref<4x16xf32, #tpu.memory_space<vmem>>, vector<4x16xf32>
    %cst = arith.constant dense<0.000000e+00> : vector<8x16xf32>
    %9 = tpu.matmul %7, %8, %cst {dimension_numbers = #tpu.dot_dimension_numbers<[1], [0], [0], [1], [0, 0, 1, 1], [], []>} : vector<8x4xf32>, vector<4x16xf32>, vector<8x16xf32> -> vector<8x16xf32>
    %c0_8 = arith.constant 0 : index
    %c0_9 = arith.constant 0 : index
    %10 = vector.load %arg5[%c0_8, %c0_9] : memref<1x16xf32, #tpu.memory_space<vmem>>, vector<1x16xf32>
    %11 = vector.broadcast %10 : vector<1x16xf32> to vector<8x16xf32>
    %12 = arith.addf %9, %11 : vector<8x16xf32>
    %c0_10 = arith.constant 0 : index
    %c0_11 = arith.constant 0 : index
    %c0_12 = arith.constant 0 : index
    %13 = vector.load %arg6[%c0_10, %c0_11, %c0_12] : memref<1x1x16xf32, #tpu.memory_space<vmem>>, vector<1x1x16xf32>
    %14 = vector.shape_cast %13 : vector<1x1x16xf32> to vector<1x16xf32>
    %15 = vector.broadcast %14 : vector<1x16xf32> to vector<8x16xf32>
    %16 = arith.addf %12, %15 : vector<8x16xf32>
    %c0_13 = arith.constant 0 : index
    %c0_14 = arith.constant 0 : index
    %c0_15 = arith.constant 0 : index
    %17 = vector.load %arg7[%c0_13, %c0_14, %c0_15] : memref<1x8x16xf32, #tpu.memory_space<vmem>>, vector<1x8x16xf32>
    %18 = vector.shape_cast %17 : vector<1x8x16xf32> to vector<8x16xf32>
    %19 = vector.shape_cast %16 : vector<8x16xf32> to vector<1x8x16xf32>
    tpu.vector_store %arg7[%c0_13, %c0_14, %c0_15], %19 {strides = array<i32>} : memref<1x8x16xf32, #tpu.memory_space<vmem>>, vector<1x8x16xf32>,
    return
  }
  func.func @transform_0(%arg0: i32) -> (i32, i32, i32) {
    %c0_i32 = arith.constant 0 : i32
    %c0_i32_0 = arith.constant 0 : i32
    %c0_i32_1 = arith.constant 0 : i32
    return %arg0, %c0_i32, %c0_i32_0 : i32, i32, i32
  }
  func.func @transform_1(%arg0: i32) -> (i32, i32) {
    %c0_i32 = arith.constant 0 : i32
    %c0_i32_0 = arith.constant 0 : i32
    %c0_i32_1 = arith.constant 0 : i32
    return %c0_i32, %c0_i32_0 : i32, i32
  }
  func.func @transform_2(%arg0: i32) -> (i32, i32) {
    %c0_i32 = arith.constant 0 : i32
    %c0_i32_0 = arith.constant 0 : i32
    %c0_i32_1 = arith.constant 0 : i32
    return %c0_i32, %c0_i32_0 : i32, i32
  }
  func.func @transform_3(%arg0: i32) -> (i32, i32) {
    %c0_i32 = arith.constant 0 : i32
    %c0_i32_0 = arith.constant 0 : i32
    %c0_i32_1 = arith.constant 0 : i32
    return %c0_i32, %c0_i32_0 : i32, i32
  }
  func.func @transform_4(%arg0: i32) -> (i32, i32) {
    %c0_i32 = arith.constant 0 : i32
    %c0_i32_0 = arith.constant 0 : i32
    %c0_i32_1 = arith.constant 0 : i32
    return %c0_i32, %c0_i32_0 : i32, i32
  }
  func.func @transform_5(%arg0: i32) -> (i32, i32, i32) {
    %c0_i32 = arith.constant 0 : i32
    %c0_i32_0 = arith.constant 0 : i32
    %c0_i32_1 = arith.constant 0 : i32
    return %arg0, %c0_i32, %c0_i32_0 : i32, i32, i32
  }
  func.func @transform_6(%arg0: i32) -> (i32, i32, i32) {
    %c0_i32 = arith.constant 0 : i32
    %c0_i32_0 = arith.constant 0 : i32
    %c0_i32_1 = arith.constant 0 : i32
    return %arg0, %c0_i32, %c0_i32_0 : i32, i32, i32
  }
}

module attributes {stable_mosaic.version = 11 : i64} {
  func.func @_linear_kernel(%arg0: i32, %arg1: memref<16x16xf32, #tpu.memory_space<vmem>>, %arg2: memref<16x48xf32, #tpu.memory_space<vmem>>, %arg3: memref<1x48xf32, #tpu.memory_space<vmem>>, %arg4: memref<16x48xf32, #tpu.memory_space<vmem>>) attributes {dimension_semantics = [#tpu.dimension_semantics<parallel>], iteration_bounds = array<i64: 1>, scalar_prefetch = 0 : i64, scratch_operands = 0 : i64, tpu.core_type = #tpu.core_type<tc>, window_params = [{transform_indices = @transform_0, window_bounds = array<i64: 16, 16>}, {pipeline_mode = #tpu.pipeline_mode<synchronous>, transform_indices = @transform_1, window_bounds = array<i64: 16, 48>}, {pipeline_mode = #tpu.pipeline_mode<synchronous>, transform_indices = @transform_2, window_bounds = array<i64: 1, 48>}, {transform_indices = @transform_3, window_bounds = array<i64: 16, 48>}]} {
    %c0 = arith.constant 0 : index
    %c0_0 = arith.constant 0 : index
    %0 = vector.load %arg1[%c0, %c0_0] : memref<16x16xf32, #tpu.memory_space<vmem>>, vector<16x16xf32>
    %c0_1 = arith.constant 0 : index
    %c0_2 = arith.constant 0 : index
    %1 = vector.load %arg2[%c0_1, %c0_2] : memref<16x48xf32, #tpu.memory_space<vmem>>, vector<16x48xf32>
    %cst = arith.constant dense<0.000000e+00> : vector<16x48xf32>
    %2 = tpu.matmul %0, %1, %cst {dimension_numbers = #tpu.dot_dimension_numbers<[1], [0], [0], [1], [0, 0, 1, 1], [], []>} : vector<16x16xf32>, vector<16x48xf32>, vector<16x48xf32> -> vector<16x48xf32>
    %c0_3 = arith.constant 0 : index
    %c0_4 = arith.constant 0 : index
    %3 = vector.load %arg3[%c0_3, %c0_4] : memref<1x48xf32, #tpu.memory_space<vmem>>, vector<1x48xf32>
    %4 = vector.broadcast %3 : vector<1x48xf32> to vector<16x48xf32>
    %5 = arith.addf %2, %4 : vector<16x48xf32>
    %c0_5 = arith.constant 0 : index
    %c0_6 = arith.constant 0 : index
    %6 = vector.load %arg4[%c0_5, %c0_6] : memref<16x48xf32, #tpu.memory_space<vmem>>, vector<16x48xf32>
    tpu.vector_store %arg4[%c0_5, %c0_6], %5 {strides = array<i32>} : memref<16x48xf32, #tpu.memory_space<vmem>>, vector<16x48xf32>,
    return
  }
  func.func @transform_0(%arg0: i32) -> (i32, i32) {
    %c0_i32 = arith.constant 0 : i32
    %c0_i32_0 = arith.constant 0 : i32
    return %arg0, %c0_i32 : i32, i32
  }
  func.func @transform_1(%arg0: i32) -> (i32, i32) {
    %c0_i32 = arith.constant 0 : i32
    %c0_i32_0 = arith.constant 0 : i32
    %c0_i32_1 = arith.constant 0 : i32
    return %c0_i32, %c0_i32_0 : i32, i32
  }
  func.func @transform_2(%arg0: i32) -> (i32, i32) {
    %c0_i32 = arith.constant 0 : i32
    %c0_i32_0 = arith.constant 0 : i32
    %c0_i32_1 = arith.constant 0 : i32
    return %c0_i32, %c0_i32_0 : i32, i32
  }
  func.func @transform_3(%arg0: i32) -> (i32, i32) {
    %c0_i32 = arith.constant 0 : i32
    %c0_i32_0 = arith.constant 0 : i32
    return %arg0, %c0_i32 : i32, i32
  }
}

module attributes {stable_mosaic.version = 11 : i64} {
  func.func @_attention_kernel(%arg0: i32, %arg1: memref<1x8x2xf32, #tpu.memory_space<vmem>>, %arg2: memref<1x8x2xf32, #tpu.memory_space<vmem>>, %arg3: memref<1x8x2xf32, #tpu.memory_space<vmem>>, %arg4: memref<1x8x2xf32, #tpu.memory_space<vmem>>) attributes {dimension_semantics = [#tpu.dimension_semantics<parallel>], iteration_bounds = array<i64: 16>, scalar_prefetch = 0 : i64, scratch_operands = 0 : i64, tpu.core_type = #tpu.core_type<tc>, window_params = [{transform_indices = @transform_0, window_bounds = array<i64: 1, 8, 2>}, {transform_indices = @transform_1, window_bounds = array<i64: 1, 8, 2>}, {transform_indices = @transform_2, window_bounds = array<i64: 1, 8, 2>}, {transform_indices = @transform_3, window_bounds = array<i64: 1, 8, 2>}]} {
    %c0 = arith.constant 0 : index
    %c0_0 = arith.constant 0 : index
    %c0_1 = arith.constant 0 : index
    %0 = vector.load %arg1[%c0, %c0_0, %c0_1] : memref<1x8x2xf32, #tpu.memory_space<vmem>>, vector<1x8x2xf32>
    %1 = vector.shape_cast %0 : vector<1x8x2xf32> to vector<8x2xf32>
    %c0_2 = arith.constant 0 : index
    %c0_3 = arith.constant 0 : index
    %c0_4 = arith.constant 0 : index
    %2 = vector.load %arg2[%c0_2, %c0_3, %c0_4] : memref<1x8x2xf32, #tpu.memory_space<vmem>>, vector<1x8x2xf32>
    %3 = vector.shape_cast %2 : vector<1x8x2xf32> to vector<8x2xf32>
    %c0_5 = arith.constant 0 : index
    %c0_6 = arith.constant 0 : index
    %c0_7 = arith.constant 0 : index
    %4 = vector.load %arg3[%c0_5, %c0_6, %c0_7] : memref<1x8x2xf32, #tpu.memory_space<vmem>>, vector<1x8x2xf32>
    %5 = vector.shape_cast %4 : vector<1x8x2xf32> to vector<8x2xf32>
    %cst = arith.constant dense<0.000000e+00> : vector<8x8xf32>
    %6 = tpu.matmul %1, %3, %cst {dimension_numbers = #tpu.dot_dimension_numbers<[1], [1], [0], [0], [0, 0, 1, 0], [], []>} : vector<8x2xf32>, vector<8x2xf32>, vector<8x8xf32> -> vector<8x8xf32>
    %cst_8 = arith.constant 0.707106769 : f32
    %7 = vector.broadcast %cst_8 : f32 to vector<8x8xf32>
    %8 = arith.mulf %6, %7 : vector<8x8xf32>
    %cst_9 = arith.constant dense<0xFF800000> : vector<8xf32>
    %9 = vector.multi_reduction <maximumf>, %8, %cst_9 [1] : vector<8x8xf32> to vector<8xf32>
    %10 = vector.shape_cast %9 : vector<8xf32> to vector<8x1xf32>
    %11 = vector.broadcast %10 : vector<8x1xf32> to vector<8x8xf32>
    %12 = arith.subf %8, %11 : vector<8x8xf32>
    %13 = math.exp %12 : vector<8x8xf32>
    %cst_10 = arith.constant dense<0.000000e+00> : vector<8xf32>
    %14 = vector.multi_reduction <add>, %13, %cst_10 [1] : vector<8x8xf32> to vector<8xf32>
    %15 = vector.shape_cast %14 : vector<8xf32> to vector<8x1xf32>
    %16 = vector.broadcast %15 : vector<8x1xf32> to vector<8x8xf32>
    %17 = arith.divf %13, %16 : vector<8x8xf32>
    %cst_11 = arith.constant dense<0.000000e+00> : vector<8x2xf32>
    %18 = tpu.matmul %17, %5, %cst_11 {dimension_numbers = #tpu.dot_dimension_numbers<[1], [0], [0], [1], [0, 0, 1, 1], [], []>} : vector<8x8xf32>, vector<8x2xf32>, vector<8x2xf32> -> vector<8x2xf32>
    %c0_12 = arith.constant 0 : index
    %c0_13 = arith.constant 0 : index
    %c0_14 = arith.constant 0 : index
    %19 = vector.load %arg4[%c0_12, %c0_13, %c0_14] : memref<1x8x2xf32, #tpu.memory_space<vmem>>, vector<1x8x2xf32>
    %20 = vector.shape_cast %19 : vector<1x8x2xf32> to vector<8x2xf32>
    %21 = vector.shape_cast %18 : vector<8x2xf32> to vector<1x8x2xf32>
    tpu.vector_store %arg4[%c0_12, %c0_13, %c0_14], %21 {strides = array<i32>} : memref<1x8x2xf32, #tpu.memory_space<vmem>>, vector<1x8x2xf32>,
    return
  }
  func.func @transform_0(%arg0: i32) -> (i32, i32, i32) {
    %c0_i32 = arith.constant 0 : i32
    %c0_i32_0 = arith.constant 0 : i32
    %c0_i32_1 = arith.constant 0 : i32
    return %arg0, %c0_i32, %c0_i32_0 : i32, i32, i32
  }
  func.func @transform_1(%arg0: i32) -> (i32, i32, i32) {
    %c0_i32 = arith.constant 0 : i32
    %c0_i32_0 = arith.constant 0 : i32
    %c0_i32_1 = arith.constant 0 : i32
    return %arg0, %c0_i32, %c0_i32_0 : i32, i32, i32
  }
  func.func @transform_2(%arg0: i32) -> (i32, i32, i32) {
    %c0_i32 = arith.constant 0 : i32
    %c0_i32_0 = arith.constant 0 : i32
    %c0_i32_1 = arith.constant 0 : i32
    return %arg0, %c0_i32, %c0_i32_0 : i32, i32, i32
  }
  func.func @transform_3(%arg0: i32) -> (i32, i32, i32) {
    %c0_i32 = arith.constant 0 : i32
    %c0_i32_0 = arith.constant 0 : i32
    %c0_i32_1 = arith.constant 0 : i32
    return %arg0, %c0_i32, %c0_i32_0 : i32, i32, i32
  }
}

module attributes {stable_mosaic.version = 11 : i64} {
  func.func @_attn_out_ln_kernel(%arg0: i32, %arg1: memref<16x16xf32, #tpu.memory_space<vmem>>, %arg2: memref<16x16xf32, #tpu.memory_space<vmem>>, %arg3: memref<16x16xf32, #tpu.memory_space<vmem>>, %arg4: memref<1x16xf32, #tpu.memory_space<vmem>>, %arg5: memref<1x16xf32, #tpu.memory_space<vmem>>, %arg6: memref<1x16xf32, #tpu.memory_space<vmem>>, %arg7: memref<16x16xf32, #tpu.memory_space<vmem>>) attributes {dimension_semantics = [#tpu.dimension_semantics<parallel>], iteration_bounds = array<i64: 1>, scalar_prefetch = 0 : i64, scratch_operands = 0 : i64, tpu.core_type = #tpu.core_type<tc>, window_params = [{transform_indices = @transform_0, window_bounds = array<i64: 16, 16>}, {transform_indices = @transform_1, window_bounds = array<i64: 16, 16>}, {pipeline_mode = #tpu.pipeline_mode<synchronous>, transform_indices = @transform_2, window_bounds = array<i64: 16, 16>}, {pipeline_mode = #tpu.pipeline_mode<synchronous>, transform_indices = @transform_3, window_bounds = array<i64: 1, 16>}, {pipeline_mode = #tpu.pipeline_mode<synchronous>, transform_indices = @transform_4, window_bounds = array<i64: 1, 16>}, {pipeline_mode = #tpu.pipeline_mode<synchronous>, transform_indices = @transform_5, window_bounds = array<i64: 1, 16>}, {transform_indices = @transform_6, window_bounds = array<i64: 16, 16>}]} {
    %c0 = arith.constant 0 : index
    %c0_0 = arith.constant 0 : index
    %0 = vector.load %arg2[%c0, %c0_0] : memref<16x16xf32, #tpu.memory_space<vmem>>, vector<16x16xf32>
    %c0_1 = arith.constant 0 : index
    %c0_2 = arith.constant 0 : index
    %1 = vector.load %arg3[%c0_1, %c0_2] : memref<16x16xf32, #tpu.memory_space<vmem>>, vector<16x16xf32>
    %cst = arith.constant dense<0.000000e+00> : vector<16x16xf32>
    %2 = tpu.matmul %0, %1, %cst {dimension_numbers = #tpu.dot_dimension_numbers<[1], [0], [0], [1], [0, 0, 1, 1], [], []>} : vector<16x16xf32>, vector<16x16xf32>, vector<16x16xf32> -> vector<16x16xf32>
    %c0_3 = arith.constant 0 : index
    %c0_4 = arith.constant 0 : index
    %3 = vector.load %arg4[%c0_3, %c0_4] : memref<1x16xf32, #tpu.memory_space<vmem>>, vector<1x16xf32>
    %4 = vector.broadcast %3 : vector<1x16xf32> to vector<16x16xf32>
    %5 = arith.addf %2, %4 : vector<16x16xf32>
    %c0_5 = arith.constant 0 : index
    %c0_6 = arith.constant 0 : index
    %6 = vector.load %arg1[%c0_5, %c0_6] : memref<16x16xf32, #tpu.memory_space<vmem>>, vector<16x16xf32>
    %7 = arith.addf %6, %5 : vector<16x16xf32>
    %c0_7 = arith.constant 0 : index
    %c0_8 = arith.constant 0 : index
    %8 = vector.load %arg5[%c0_7, %c0_8] : memref<1x16xf32, #tpu.memory_space<vmem>>, vector<1x16xf32>
    %c0_9 = arith.constant 0 : index
    %c0_10 = arith.constant 0 : index
    %9 = vector.load %arg6[%c0_9, %c0_10] : memref<1x16xf32, #tpu.memory_space<vmem>>, vector<1x16xf32>
    %cst_11 = arith.constant dense<0.000000e+00> : vector<16xf32>
    %10 = vector.multi_reduction <add>, %7, %cst_11 [1] : vector<16x16xf32> to vector<16xf32>
    %11 = vector.shape_cast %10 : vector<16xf32> to vector<16x1xf32>
    %cst_12 = arith.constant 1.600000e+01 : f32
    %12 = vector.broadcast %cst_12 : f32 to vector<16x1xf32>
    %13 = arith.divf %11, %12 : vector<16x1xf32>
    %14 = vector.broadcast %13 : vector<16x1xf32> to vector<16x16xf32>
    %15 = arith.subf %7, %14 : vector<16x16xf32>
    %16 = arith.mulf %15, %15 : vector<16x16xf32>
    %cst_13 = arith.constant dense<0.000000e+00> : vector<16xf32>
    %17 = vector.multi_reduction <add>, %16, %cst_13 [1] : vector<16x16xf32> to vector<16xf32>
    %18 = vector.shape_cast %17 : vector<16xf32> to vector<16x1xf32>
    %cst_14 = arith.constant 1.600000e+01 : f32
    %19 = vector.broadcast %cst_14 : f32 to vector<16x1xf32>
    %20 = arith.divf %18, %19 : vector<16x1xf32>
    %cst_15 = arith.constant 9.99999974E-6 : f32
    %21 = vector.broadcast %cst_15 : f32 to vector<16x1xf32>
    %22 = arith.addf %20, %21 : vector<16x1xf32>
    %23 = math.rsqrt %22 : vector<16x1xf32>
    %24 = vector.broadcast %23 : vector<16x1xf32> to vector<16x16xf32>
    %25 = arith.mulf %15, %24 : vector<16x16xf32>
    %26 = vector.broadcast %8 : vector<1x16xf32> to vector<16x16xf32>
    %27 = arith.mulf %25, %26 : vector<16x16xf32>
    %28 = vector.broadcast %9 : vector<1x16xf32> to vector<16x16xf32>
    %29 = arith.addf %27, %28 : vector<16x16xf32>
    %c0_16 = arith.constant 0 : index
    %c0_17 = arith.constant 0 : index
    %30 = vector.load %arg7[%c0_16, %c0_17] : memref<16x16xf32, #tpu.memory_space<vmem>>, vector<16x16xf32>
    tpu.vector_store %arg7[%c0_16, %c0_17], %29 {strides = array<i32>} : memref<16x16xf32, #tpu.memory_space<vmem>>, vector<16x16xf32>,
    return
  }
  func.func @transform_0(%arg0: i32) -> (i32, i32) {
    %c0_i32 = arith.constant 0 : i32
    %c0_i32_0 = arith.constant 0 : i32
    return %arg0, %c0_i32 : i32, i32
  }
  func.func @transform_1(%arg0: i32) -> (i32, i32) {
    %c0_i32 = arith.constant 0 : i32
    %c0_i32_0 = arith.constant 0 : i32
    return %arg0, %c0_i32 : i32, i32
  }
  func.func @transform_2(%arg0: i32) -> (i32, i32) {
    %c0_i32 = arith.constant 0 : i32
    %c0_i32_0 = arith.constant 0 : i32
    %c0_i32_1 = arith.constant 0 : i32
    return %c0_i32, %c0_i32_0 : i32, i32
  }
  func.func @transform_3(%arg0: i32) -> (i32, i32) {
    %c0_i32 = arith.constant 0 : i32
    %c0_i32_0 = arith.constant 0 : i32
    %c0_i32_1 = arith.constant 0 : i32
    return %c0_i32, %c0_i32_0 : i32, i32
  }
  func.func @transform_4(%arg0: i32) -> (i32, i32) {
    %c0_i32 = arith.constant 0 : i32
    %c0_i32_0 = arith.constant 0 : i32
    %c0_i32_1 = arith.constant 0 : i32
    return %c0_i32, %c0_i32_0 : i32, i32
  }
  func.func @transform_5(%arg0: i32) -> (i32, i32) {
    %c0_i32 = arith.constant 0 : i32
    %c0_i32_0 = arith.constant 0 : i32
    %c0_i32_1 = arith.constant 0 : i32
    return %c0_i32, %c0_i32_0 : i32, i32
  }
  func.func @transform_6(%arg0: i32) -> (i32, i32) {
    %c0_i32 = arith.constant 0 : i32
    %c0_i32_0 = arith.constant 0 : i32
    return %arg0, %c0_i32 : i32, i32
  }
}

module attributes {stable_mosaic.version = 11 : i64} {
  func.func @_ffn_ln_kernel(%arg0: i32, %arg1: memref<16x16xf32, #tpu.memory_space<vmem>>, %arg2: memref<16x1000xf32, #tpu.memory_space<vmem>>, %arg3: memref<1x1000xf32, #tpu.memory_space<vmem>>, %arg4: memref<1000x16xf32, #tpu.memory_space<vmem>>, %arg5: memref<1x16xf32, #tpu.memory_space<vmem>>, %arg6: memref<1x16xf32, #tpu.memory_space<vmem>>, %arg7: memref<1x16xf32, #tpu.memory_space<vmem>>, %arg8: memref<16x16xf32, #tpu.memory_space<vmem>>) attributes {dimension_semantics = [#tpu.dimension_semantics<parallel>], iteration_bounds = array<i64: 1>, scalar_prefetch = 0 : i64, scratch_operands = 0 : i64, tpu.core_type = #tpu.core_type<tc>, window_params = [{transform_indices = @transform_0, window_bounds = array<i64: 16, 16>}, {pipeline_mode = #tpu.pipeline_mode<synchronous>, transform_indices = @transform_1, window_bounds = array<i64: 16, 1000>}, {pipeline_mode = #tpu.pipeline_mode<synchronous>, transform_indices = @transform_2, window_bounds = array<i64: 1, 1000>}, {pipeline_mode = #tpu.pipeline_mode<synchronous>, transform_indices = @transform_3, window_bounds = array<i64: 1000, 16>}, {pipeline_mode = #tpu.pipeline_mode<synchronous>, transform_indices = @transform_4, window_bounds = array<i64: 1, 16>}, {pipeline_mode = #tpu.pipeline_mode<synchronous>, transform_indices = @transform_5, window_bounds = array<i64: 1, 16>}, {pipeline_mode = #tpu.pipeline_mode<synchronous>, transform_indices = @transform_6, window_bounds = array<i64: 1, 16>}, {transform_indices = @transform_7, window_bounds = array<i64: 16, 16>}]} {
    %c0 = arith.constant 0 : index
    %c0_0 = arith.constant 0 : index
    %0 = vector.load %arg1[%c0, %c0_0] : memref<16x16xf32, #tpu.memory_space<vmem>>, vector<16x16xf32>
    %c0_1 = arith.constant 0 : index
    %c0_2 = arith.constant 0 : index
    %1 = vector.load %arg2[%c0_1, %c0_2] : memref<16x1000xf32, #tpu.memory_space<vmem>>, vector<16x1000xf32>
    %cst = arith.constant dense<0.000000e+00> : vector<16x1000xf32>
    %2 = tpu.matmul %0, %1, %cst {dimension_numbers = #tpu.dot_dimension_numbers<[1], [0], [0], [1], [0, 0, 1, 1], [], []>} : vector<16x16xf32>, vector<16x1000xf32>, vector<16x1000xf32> -> vector<16x1000xf32>
    %c0_3 = arith.constant 0 : index
    %c0_4 = arith.constant 0 : index
    %3 = vector.load %arg3[%c0_3, %c0_4] : memref<1x1000xf32, #tpu.memory_space<vmem>>, vector<1x1000xf32>
    %4 = vector.broadcast %3 : vector<1x1000xf32> to vector<16x1000xf32>
    %5 = arith.addf %2, %4 : vector<16x1000xf32>
    %cst_5 = arith.constant 0.000000e+00 : f32
    %6 = vector.broadcast %cst_5 : f32 to vector<16x1000xf32>
    %7 = arith.maximumf %5, %6 : vector<16x1000xf32>
    %c0_6 = arith.constant 0 : index
    %c0_7 = arith.constant 0 : index
    %8 = vector.load %arg4[%c0_6, %c0_7] : memref<1000x16xf32, #tpu.memory_space<vmem>>, vector<1000x16xf32>
    %cst_8 = arith.constant dense<0.000000e+00> : vector<16x16xf32>
    %9 = tpu.matmul %7, %8, %cst_8 {dimension_numbers = #tpu.dot_dimension_numbers<[1], [0], [0], [1], [0, 0, 1, 1], [], []>} : vector<16x1000xf32>, vector<1000x16xf32>, vector<16x16xf32> -> vector<16x16xf32>
    %c0_9 = arith.constant 0 : index
    %c0_10 = arith.constant 0 : index
    %10 = vector.load %arg5[%c0_9, %c0_10] : memref<1x16xf32, #tpu.memory_space<vmem>>, vector<1x16xf32>
    %11 = vector.broadcast %10 : vector<1x16xf32> to vector<16x16xf32>
    %12 = arith.addf %9, %11 : vector<16x16xf32>
    %13 = arith.addf %0, %12 : vector<16x16xf32>
    %c0_11 = arith.constant 0 : index
    %c0_12 = arith.constant 0 : index
    %14 = vector.load %arg6[%c0_11, %c0_12] : memref<1x16xf32, #tpu.memory_space<vmem>>, vector<1x16xf32>
    %c0_13 = arith.constant 0 : index
    %c0_14 = arith.constant 0 : index
    %15 = vector.load %arg7[%c0_13, %c0_14] : memref<1x16xf32, #tpu.memory_space<vmem>>, vector<1x16xf32>
    %cst_15 = arith.constant dense<0.000000e+00> : vector<16xf32>
    %16 = vector.multi_reduction <add>, %13, %cst_15 [1] : vector<16x16xf32> to vector<16xf32>
    %17 = vector.shape_cast %16 : vector<16xf32> to vector<16x1xf32>
    %cst_16 = arith.constant 1.600000e+01 : f32
    %18 = vector.broadcast %cst_16 : f32 to vector<16x1xf32>
    %19 = arith.divf %17, %18 : vector<16x1xf32>
    %20 = vector.broadcast %19 : vector<16x1xf32> to vector<16x16xf32>
    %21 = arith.subf %13, %20 : vector<16x16xf32>
    %22 = arith.mulf %21, %21 : vector<16x16xf32>
    %cst_17 = arith.constant dense<0.000000e+00> : vector<16xf32>
    %23 = vector.multi_reduction <add>, %22, %cst_17 [1] : vector<16x16xf32> to vector<16xf32>
    %24 = vector.shape_cast %23 : vector<16xf32> to vector<16x1xf32>
    %cst_18 = arith.constant 1.600000e+01 : f32
    %25 = vector.broadcast %cst_18 : f32 to vector<16x1xf32>
    %26 = arith.divf %24, %25 : vector<16x1xf32>
    %cst_19 = arith.constant 9.99999974E-6 : f32
    %27 = vector.broadcast %cst_19 : f32 to vector<16x1xf32>
    %28 = arith.addf %26, %27 : vector<16x1xf32>
    %29 = math.rsqrt %28 : vector<16x1xf32>
    %30 = vector.broadcast %29 : vector<16x1xf32> to vector<16x16xf32>
    %31 = arith.mulf %21, %30 : vector<16x16xf32>
    %32 = vector.broadcast %14 : vector<1x16xf32> to vector<16x16xf32>
    %33 = arith.mulf %31, %32 : vector<16x16xf32>
    %34 = vector.broadcast %15 : vector<1x16xf32> to vector<16x16xf32>
    %35 = arith.addf %33, %34 : vector<16x16xf32>
    %c0_20 = arith.constant 0 : index
    %c0_21 = arith.constant 0 : index
    %36 = vector.load %arg8[%c0_20, %c0_21] : memref<16x16xf32, #tpu.memory_space<vmem>>, vector<16x16xf32>
    tpu.vector_store %arg8[%c0_20, %c0_21], %35 {strides = array<i32>} : memref<16x16xf32, #tpu.memory_space<vmem>>, vector<16x16xf32>,
    return
  }
  func.func @transform_0(%arg0: i32) -> (i32, i32) {
    %c0_i32 = arith.constant 0 : i32
    %c0_i32_0 = arith.constant 0 : i32
    return %arg0, %c0_i32 : i32, i32
  }
  func.func @transform_1(%arg0: i32) -> (i32, i32) {
    %c0_i32 = arith.constant 0 : i32
    %c0_i32_0 = arith.constant 0 : i32
    %c0_i32_1 = arith.constant 0 : i32
    return %c0_i32, %c0_i32_0 : i32, i32
  }
  func.func @transform_2(%arg0: i32) -> (i32, i32) {
    %c0_i32 = arith.constant 0 : i32
    %c0_i32_0 = arith.constant 0 : i32
    %c0_i32_1 = arith.constant 0 : i32
    return %c0_i32, %c0_i32_0 : i32, i32
  }
  func.func @transform_3(%arg0: i32) -> (i32, i32) {
    %c0_i32 = arith.constant 0 : i32
    %c0_i32_0 = arith.constant 0 : i32
    %c0_i32_1 = arith.constant 0 : i32
    return %c0_i32, %c0_i32_0 : i32, i32
  }
  func.func @transform_4(%arg0: i32) -> (i32, i32) {
    %c0_i32 = arith.constant 0 : i32
    %c0_i32_0 = arith.constant 0 : i32
    %c0_i32_1 = arith.constant 0 : i32
    return %c0_i32, %c0_i32_0 : i32, i32
  }
  func.func @transform_5(%arg0: i32) -> (i32, i32) {
    %c0_i32 = arith.constant 0 : i32
    %c0_i32_0 = arith.constant 0 : i32
    %c0_i32_1 = arith.constant 0 : i32
    return %c0_i32, %c0_i32_0 : i32, i32
  }
  func.func @transform_6(%arg0: i32) -> (i32, i32) {
    %c0_i32 = arith.constant 0 : i32
    %c0_i32_0 = arith.constant 0 : i32
    %c0_i32_1 = arith.constant 0 : i32
    return %c0_i32, %c0_i32_0 : i32, i32
  }
  func.func @transform_7(%arg0: i32) -> (i32, i32) {
    %c0_i32 = arith.constant 0 : i32
    %c0_i32_0 = arith.constant 0 : i32
    return %arg0, %c0_i32 : i32, i32
  }
}

module attributes {stable_mosaic.version = 11 : i64} {
  func.func @_linear_kernel(%arg0: i32, %arg1: memref<16x16xf32, #tpu.memory_space<vmem>>, %arg2: memref<16x3xf32, #tpu.memory_space<vmem>>, %arg3: memref<1x3xf32, #tpu.memory_space<vmem>>, %arg4: memref<16x3xf32, #tpu.memory_space<vmem>>) attributes {dimension_semantics = [#tpu.dimension_semantics<parallel>], iteration_bounds = array<i64: 1>, scalar_prefetch = 0 : i64, scratch_operands = 0 : i64, tpu.core_type = #tpu.core_type<tc>, window_params = [{transform_indices = @transform_0, window_bounds = array<i64: 16, 16>}, {pipeline_mode = #tpu.pipeline_mode<synchronous>, transform_indices = @transform_1, window_bounds = array<i64: 16, 3>}, {pipeline_mode = #tpu.pipeline_mode<synchronous>, transform_indices = @transform_2, window_bounds = array<i64: 1, 3>}, {transform_indices = @transform_3, window_bounds = array<i64: 16, 3>}]} {
    %c0 = arith.constant 0 : index
    %c0_0 = arith.constant 0 : index
    %0 = vector.load %arg1[%c0, %c0_0] : memref<16x16xf32, #tpu.memory_space<vmem>>, vector<16x16xf32>
    %c0_1 = arith.constant 0 : index
    %c0_2 = arith.constant 0 : index
    %1 = vector.load %arg2[%c0_1, %c0_2] : memref<16x3xf32, #tpu.memory_space<vmem>>, vector<16x3xf32>
    %cst = arith.constant dense<0.000000e+00> : vector<16x3xf32>
    %2 = tpu.matmul %0, %1, %cst {dimension_numbers = #tpu.dot_dimension_numbers<[1], [0], [0], [1], [0, 0, 1, 1], [], []>} : vector<16x16xf32>, vector<16x3xf32>, vector<16x3xf32> -> vector<16x3xf32>
    %c0_3 = arith.constant 0 : index
    %c0_4 = arith.constant 0 : index
    %3 = vector.load %arg3[%c0_3, %c0_4] : memref<1x3xf32, #tpu.memory_space<vmem>>, vector<1x3xf32>
    %4 = vector.broadcast %3 : vector<1x3xf32> to vector<16x3xf32>
    %5 = arith.addf %2, %4 : vector<16x3xf32>
    %c0_5 = arith.constant 0 : index
    %c0_6 = arith.constant 0 : index
    %6 = vector.load %arg4[%c0_5, %c0_6] : memref<16x3xf32, #tpu.memory_space<vmem>>, vector<16x3xf32>
    tpu.vector_store %arg4[%c0_5, %c0_6], %5 {strides = array<i32>} : memref<16x3xf32, #tpu.memory_space<vmem>>, vector<16x3xf32>,
    return
  }
  func.func @transform_0(%arg0: i32) -> (i32, i32) {
    %c0_i32 = arith.constant 0 : i32
    %c0_i32_0 = arith.constant 0 : i32
    return %arg0, %c0_i32 : i32, i32
  }
  func.func @transform_1(%arg0: i32) -> (i32, i32) {
    %c0_i32 = arith.constant 0 : i32
    %c0_i32_0 = arith.constant 0 : i32
    %c0_i32_1 = arith.constant 0 : i32
    return %c0_i32, %c0_i32_0 : i32, i32
  }
  func.func @transform_2(%arg0: i32) -> (i32, i32) {
    %c0_i32 = arith.constant 0 : i32
    %c0_i32_0 = arith.constant 0 : i32
    %c0_i32_1 = arith.constant 0 : i32
    return %c0_i32, %c0_i32_0 : i32, i32
  }
  func.func @transform_3(%arg0: i32) -> (i32, i32) {
    %c0_i32 = arith.constant 0 : i32
    %c0_i32_0 = arith.constant 0 : i32
    return %arg0, %c0_i32 : i32, i32
  }
}

</mosaic_0001>

<llo_original>
// kernel: transformer_prediction_forward.11
$region0: #{transformer_prediction_forward.11}
  #allocation0 [shape = 'u32[]', space=smem, size = 0x4, offset = 0x4, fixed_abs, tag = 'smem constant byte address 0x4 - core index']
  #allocation1 [shape = 'u32[72,128]{1,0:T(1,128)}', space=vmem, size = 0x9000, scoped, tag = 'internal scratch']
  %s0 = inlined_call_operand.vmem [shape: f32[16,16], index: 0, kind: input, shape index: {}]
  %s1 = inlined_call_operand.vmem [shape: f32[16,48], index: 1, kind: input, shape index: {}]
  %s2 = inlined_call_operand.vmem [shape: f32[1,48], index: 2, kind: input, shape index: {}]
  %s3 = inlined_call_operand.vmem [shape: f32[16,48], index: 3, kind: output, shape index: {}]
  %s4 = sld [smem:[#allocation0]]
  $region22: #{transformer_prediction_forward.11} parent=0
    _
  %s6 = ssub.s32 1, %s4
  %s7 = scalar_select 0, %s6, %s4
  // Predicated region
  $region2: #{transformer_prediction_forward.11} parent=0 // pred_check
    _
  $region3: #{transformer_prediction_forward.11} parent=0 // pred_check_branch
    %9 = sbr.rel (0) target = $region5
  $region4: #{transformer_prediction_forward.11} parent=0 // pred_region
    _
  $region5: #{transformer_prediction_forward.11} parent=0 // pred_fallthru
    _
  // Predicated region
  $region6: #{transformer_prediction_forward.11} parent=0 // pred_check
    _
  $region7: #{transformer_prediction_forward.11} parent=0 // pred_check_branch
    %11 = sbr.rel (0) target = $region9
  $region8: #{transformer_prediction_forward.11} parent=0 // pred_region
    _
  $region9: #{transformer_prediction_forward.11} parent=0 // pred_fallthru
    _
  // Predicated region
  $region10: #{transformer_prediction_forward.11} parent=0 // pred_check
    _
  $region11: #{transformer_prediction_forward.11} parent=0 // pred_check_branch
    %13 = sbr.rel (0) target = $region13
  $region12: #{transformer_prediction_forward.11} parent=0 // pred_region
    _
  $region13: #{transformer_prediction_forward.11} parent=0 // pred_fallthru
    _
  %v14 = vld [vmem:[%s0] sm:$0xff]
  %v15 = vld [vmem:[%s0 + $0x8] sm:$0xff]
  %v16 = vld [vmem:[%s1] sm:$0xff]
  %v17 = vld [vmem:[%s1 + $0x8] sm:$0xff]
  %v18 = vld [vmem:[%s2] sm:$0x1]
  %v20 = vperm.slane %v18, 0
  %vm22 = vcmask 130048
  %v24 = vsel %vm22, %v14, 0
  %v27 = vsel %vm22, %v15, 0
  %29 = vmatpush.msra.mxu0 0.0
  %30 = vmatpush.msra.mxu0 0.0
  %31 = vmatpush.msra.mxu0 0.0
  %32 = vmatpush.msra.mxu0 0.0
  %33 = vmatpush.msra.mxu0 0.0
  %34 = vmatpush.msra.mxu0 0.0
  %35 = vmatpush.msra.mxu0 0.0
  %36 = vmatpush.msra.mxu0 0.0
  %37 = vmatpush.msra.mxu0 0.0
  %38 = vmatpush.msra.mxu0 0.0
  %39 = vmatpush.msra.mxu0 0.0
  %40 = vmatpush.msra.mxu0 0.0
  %41 = vmatpush.msra.mxu0 0.0
  %42 = vmatpush.msra.mxu0 0.0
  %43 = vmatpush.msra.mxu0 %v17
  %44 = vmatpush.msra.mxu0 %v16
  %45 = vmatmul.f32.gmra.mxu0 %v24
  %v46 = vpop.f32.mrf.mxu0
  %v47 = vadd.f32 %v20, %v46
  %48 = vmatmul.f32.gmra.mxu0 %v27
  %v49 = vpop.f32.mrf.mxu0
  %v50 = vadd.f32 %v20, %v49
  %51 = vdwg.mxu0
  %vm52 = vcmask 392192
  %53 = vst.msk [vmem:[%s3] sm:$0xff] %vm52, %v47
  %54 = vst.msk [vmem:[%s3 + $0x8] sm:$0xff] %vm52, %v50
  // Predicated region
  $region14: #{transformer_prediction_forward.11} parent=0 // pred_check
    _
  $region15: #{transformer_prediction_forward.11} parent=0 // pred_check_branch
    %56 = sbr.rel (0) target = $region17
  $region16: #{transformer_prediction_forward.11} parent=0 // pred_region
    _
  $region17: #{transformer_prediction_forward.11} parent=0 // pred_fallthru
    _
  // Predicated region
  $region18: #{transformer_prediction_forward.11} parent=0 // pred_check
    _
  $region19: #{transformer_prediction_forward.11} parent=0 // pred_check_branch
    %58 = sbr.rel (0) target = $region21
  $region20: #{transformer_prediction_forward.11} parent=0 // pred_region
    _
  $region21: #{transformer_prediction_forward.11} parent=0 // pred_fallthru
    _

// kernel: transformer_prediction_forward.10
$region0: #{transformer_prediction_forward.10}
  #allocation0 [shape = 'u32[]', space=smem, size = 0x4, offset = 0x4, fixed_abs, tag = 'smem constant byte address 0x4 - core index']
  #allocation1 [shape = 'u32[72,128]{1,0:T(1,128)}', space=vmem, size = 0x9000, scoped, tag = 'internal scratch']
  %s0 = inlined_call_operand.vmem [shape: f32[2,8,4], index: 0, kind: input, shape index: {}]
  %s1 = inlined_call_operand.vmem [shape: f32[1,4], index: 1, kind: input, shape index: {}]
  %s2 = inlined_call_operand.vmem [shape: f32[1,4], index: 2, kind: input, shape index: {}]
  %s3 = inlined_call_operand.vmem [shape: f32[4,16], index: 3, kind: input, shape index: {}]
  %s4 = inlined_call_operand.vmem [shape: f32[1,16], index: 4, kind: input, shape index: {}]
  %s5 = inlined_call_operand.vmem [shape: f32[2,1,16], index: 5, kind: input, shape index: {}]
  %s6 = inlined_call_operand.vmem [shape: f32[2,8,16], index: 6, kind: output, shape index: {}]
  %s7 = sld [smem:[#allocation0]]
  $region57: #{transformer_prediction_forward.10} parent=0
    _
  %s9 = ssub.s32 1, %s7
  %s10 = scalar_select 0, %s9, %s7
  loop: start=0, step=1, limit=4
  $region2: #{transformer_prediction_forward.10} parent=0 // loop_pre_header
    _
  $region3: #{transformer_prediction_forward.10} parent=0 // loop_header
    %s12 = sphi 0, %s16
    %p13 = scmp.ge.s32.totalorder %s12, 4
    %s22 = sphi 0, %s24
    %s25 = sphi 0, %s22
    %s26 = sphi 0, %s25
    %s42 = sphi 0, %s26
    %s46 = sphi 0, %s46
    %s48 = sphi 0, %s46
    %s49 = sphi 0, %s48
    %s63 = sphi 0, %s49
    %s67 = sphi 0, %s67
    %s69 = sphi 0, %s67
    %s70 = sphi 0, %s69
    %s84 = sphi 0, %s70
    %s88 = sphi 0, %s88
    %s90 = sphi 0, %s88
    %s91 = sphi 0, %s90
    %s105 = sphi 0, %s91
    %s109 = sphi 0, %s109
    %s111 = sphi 0, %s109
    %s112 = sphi 0, %s111
    %s126 = sphi 0, %s112
    %s132 = sphi 0, %s134
    %s135 = sphi 0, %s132
    %s136 = sphi 0, %s135
    %s152 = sphi 0, %s136
    %s158 = sphi 0, %s160
    %s161 = sphi 0, %s158
    %s162 = sphi 0, %s161
    %s178 = sphi 0, %s162
  $region4: #{transformer_prediction_forward.10} parent=0 // loop_header_branch
    %15 = sbr.rel (%p13) target = $region8
  $region5: #{transformer_prediction_forward.10} parent=0 // loop_body
    %s17 = ssub.s32 %s12, 1
    %s18 = ssub.s32 %s12, 2
    %s19 = sadd.s32 %s12, 1
    %s20 = ssub.s32 %s12, %s19
    %p21 = scmp.eq.s32.totalorder %s20, 0
    %s23 = sadd.s32 %s22, 1
    %s24 = scalar_select %p21, %s22, %s23
    %p27 = pneg %p21
    %p28 = scmp.eq.s32.totalorder %s12, 1
    %p29 = por %p27, %p28
    %p30 = scmp.ne.s32.totalorder %s22, %s25
    %p31 = scmp.eq.s32.totalorder %s12, 0
    %p32 = por %p30, %p31
    %p33 = scmp.ne.s32.totalorder %s22, %s25
    %p34 = scmp.eq.s32.totalorder %s17, 1
    %p35 = por %p33, %p34
    %p36 = scmp.ne.s32.totalorder %s25, %s26
    %p37 = scmp.eq.s32.totalorder %s17, 0
    %p38 = por %p36, %p37
    %p39 = scmp.ne.s32.totalorder %s25, %s26
    %p40 = scmp.eq.s32.totalorder %s18, 1
    %p41 = por %p39, %p40
    %p43 = scmp.ne.s32.totalorder %s26, %s42
    %p44 = scmp.eq.s32.totalorder %s18, 0
    %p45 = por %p43, %p44
    %s47 = sadd.s32 %s46, 1
    %p50 = scmp.eq.s32.totalorder %s12, 1
    %p51 = scmp.ne.s32.totalorder %s46, %s48
    %p52 = scmp.eq.s32.totalorder %s12, 0
    %p53 = por %p51, %p52
    %p54 = scmp.ne.s32.totalorder %s46, %s48
    %p55 = scmp.eq.s32.totalorder %s17, 1
    %p56 = por %p54, %p55
    %p57 = scmp.ne.s32.totalorder %s48, %s49
    %p58 = scmp.eq.s32.totalorder %s17, 0
    %p59 = por %p57, %p58
    %p60 = scmp.ne.s32.totalorder %s48, %s49
    %p61 = scmp.eq.s32.totalorder %s18, 1
    %p62 = por %p60, %p61
    %p64 = scmp.ne.s32.totalorder %s49, %s63
    %p65 = scmp.eq.s32.totalorder %s18, 0
    %p66 = por %p64, %p65
    %s68 = sadd.s32 %s67, 1
    %p71 = scmp.eq.s32.totalorder %s12, 1
    %p72 = scmp.ne.s32.totalorder %s67, %s69
    %p73 = scmp.eq.s32.totalorder %s12, 0
    %p74 = por %p72, %p73
    %p75 = scmp.ne.s32.totalorder %s67, %s69
    %p76 = scmp.eq.s32.totalorder %s17, 1
    %p77 = por %p75, %p76
    %p78 = scmp.ne.s32.totalorder %s69, %s70
    %p79 = scmp.eq.s32.totalorder %s17, 0
    %p80 = por %p78, %p79
    %p81 = scmp.ne.s32.totalorder %s69, %s70
    %p82 = scmp.eq.s32.totalorder %s18, 1
    %p83 = por %p81, %p82
    %p85 = scmp.ne.s32.totalorder %s70, %s84
    %p86 = scmp.eq.s32.totalorder %s18, 0
    %p87 = por %p85, %p86
    %s89 = sadd.s32 %s88, 1
    %p92 = scmp.eq.s32.totalorder %s12, 1
    %p93 = scmp.ne.s32.totalorder %s88, %s90
    %p94 = scmp.eq.s32.totalorder %s12, 0
    %p95 = por %p93, %p94
    %p96 = scmp.ne.s32.totalorder %s88, %s90
    %p97 = scmp.eq.s32.totalorder %s17, 1
    %p98 = por %p96, %p97
    %p99 = scmp.ne.s32.totalorder %s90, %s91
    %p100 = scmp.eq.s32.totalorder %s17, 0
    %p101 = por %p99, %p100
    %p102 = scmp.ne.s32.totalorder %s90, %s91
    %p103 = scmp.eq.s32.totalorder %s18, 1
    %p104 = por %p102, %p103
    %p106 = scmp.ne.s32.totalorder %s91, %s105
    %p107 = scmp.eq.s32.totalorder %s18, 0
    %p108 = por %p106, %p107
    %s110 = sadd.s32 %s109, 1
    %p113 = scmp.eq.s32.totalorder %s12, 1
    %p114 = scmp.ne.s32.totalorder %s109, %s111
    %p115 = scmp.eq.s32.totalorder %s12, 0
    %p116 = por %p114, %p115
    %p117 = scmp.ne.s32.totalorder %s109, %s111
    %p118 = scmp.eq.s32.totalorder %s17, 1
    %p119 = por %p117, %p118
    %p120 = scmp.ne.s32.totalorder %s111, %s112
    %p121 = scmp.eq.s32.totalorder %s17, 0
    %p122 = por %p120, %p121
    %p123 = scmp.ne.s32.totalorder %s111, %s112
    %p124 = scmp.eq.s32.totalorder %s18, 1
    %p125 = por %p123, %p124
    %p127 = scmp.ne.s32.totalorder %s112, %s126
    %p128 = scmp.eq.s32.totalorder %s18, 0
    %p129 = por %p127, %p128
    %s130 = ssub.s32 %s12, %s19
    %p131 = scmp.eq.s32.totalorder %s130, 0
    %s133 = sadd.s32 %s132, 1
    %s134 = scalar_select %p131, %s132, %s133
    %p137 = pneg %p131
    %p138 = scmp.eq.s32.totalorder %s12, 1
    %p139 = por %p137, %p138
    %p140 = scmp.ne.s32.totalorder %s132, %s135
    %p141 = scmp.eq.s32.totalorder %s12, 0
    %p142 = por %p140, %p141
    %p143 = scmp.ne.s32.totalorder %s132, %s135
    %p144 = scmp.eq.s32.totalorder %s17, 1
    %p145 = por %p143, %p144
    %p146 = scmp.ne.s32.totalorder %s135, %s136
    %p147 = scmp.eq.s32.totalorder %s17, 0
    %p148 = por %p146, %p147
    %p149 = scmp.ne.s32.totalorder %s135, %s136
    %p150 = scmp.eq.s32.totalorder %s18, 1
    %p151 = por %p149, %p150
    %p153 = scmp.ne.s32.totalorder %s136, %s152
    %p154 = scmp.eq.s32.totalorder %s18, 0
    %p155 = por %p153, %p154
    %s156 = ssub.s32 %s12, %s19
    %p157 = scmp.eq.s32.totalorder %s156, 0
    %s159 = sadd.s32 %s158, 1
    %s160 = scalar_select %p157, %s158, %s159
    %p163 = pneg %p157
    %p164 = scmp.eq.s32.totalorder %s12, 1
    %p165 = por %p163, %p164
    %p166 = scmp.ne.s32.totalorder %s158, %s161
    %p167 = scmp.eq.s32.totalorder %s12, 0
    %p168 = por %p166, %p167
    %p169 = scmp.ne.s32.totalorder %s158, %s161
    %p170 = scmp.eq.s32.totalorder %s17, 1
    %p171 = por %p169, %p170
    %p172 = scmp.ne.s32.totalorder %s161, %s162
    %p173 = scmp.eq.s32.totalorder %s17, 0
    %p174 = por %p172, %p173
    %p175 = scmp.ne.s32.totalorder %s161, %s162
    %p176 = scmp.eq.s32.totalorder %s18, 1
    %p177 = por %p175, %p176
    %p179 = scmp.ne.s32.totalorder %s162, %s178
    %p180 = scmp.eq.s32.totalorder %s18, 0
    %p181 = por %p179, %p180
    %p182 = scmp.le.s32.totalorder 1, %s12
    %p183 = scmp.lt.s32.totalorder %s12, 3
    %p184 = pnand %p182, %p183
    %p185 = pneg %p184
    // Predicated region
    $region9: #{transformer_prediction_forward.10} parent=5 // pred_check
      _
    $region10: #{transformer_prediction_forward.10} parent=5 // pred_check_branch
      %187 = sbr.rel (%p184) target = $region12
    $region11: #{transformer_prediction_forward.10} parent=5 // pred_region
      %s188 = ssub.s32 %s12, 1
      // Predicated region
      $region13: #{transformer_prediction_forward.10} parent=11 // pred_check
        %p189 = pneg %p59
      $region14: #{transformer_prediction_forward.10} parent=11 // pred_check_branch
        %191 = sbr.rel (%p189) target = $region16
      $region15: #{transformer_prediction_forward.10} parent=11 // pred_region
        _
      $region16: #{transformer_prediction_forward.10} parent=11 // pred_fallthru
        _
      // Predicated region
      $region17: #{transformer_prediction_forward.10} parent=11 // pred_check
        %p192 = pneg %p80
      $region18: #{transformer_prediction_forward.10} parent=11 // pred_check_branch
        %194 = sbr.rel (%p192) target = $region20
      $region19: #{transformer_prediction_forward.10} parent=11 // pred_region
        _
      $region20: #{transformer_prediction_forward.10} parent=11 // pred_fallthru
        _
      // Predicated region
      $region21: #{transformer_prediction_forward.10} parent=11 // pred_check
        %p195 = pneg %p101
      $region22: #{transformer_prediction_forward.10} parent=11 // pred_check_branch
        %197 = sbr.rel (%p195) target = $region24
      $region23: #{transformer_prediction_forward.10} parent=11 // pred_region
        _
      $region24: #{transformer_prediction_forward.10} parent=11 // pred_fallthru
        _
      // Predicated region
      $region25: #{transformer_prediction_forward.10} parent=11 // pred_check
        %p198 = pneg %p122
      $region26: #{transformer_prediction_forward.10} parent=11 // pred_check_branch
        %200 = sbr.rel (%p198) target = $region28
      $region27: #{transformer_prediction_forward.10} parent=11 // pred_region
        _
      $region28: #{transformer_prediction_forward.10} parent=11 // pred_fallthru
        _
    $region12: #{transformer_prediction_forward.10} parent=5 // pred_fallthru
      _
    %p201 = scmp.lt.s32.totalorder %s12, 2
    // Predicated region
    $region29: #{transformer_prediction_forward.10} parent=5 // pred_check
      %p202 = pneg %p201
    $region30: #{transformer_prediction_forward.10} parent=5 // pred_check_branch
      %204 = sbr.rel (%p202) target = $region32
    $region31: #{transformer_prediction_forward.10} parent=5 // pred_region
      // Predicated region
      $region33: #{transformer_prediction_forward.10} parent=31 // pred_check
        %p205 = pneg %p32
      $region34: #{transformer_prediction_forward.10} parent=31 // pred_check_branch
        %207 = sbr.rel (%p205) target = $region36
      $region35: #{transformer_prediction_forward.10} parent=31 // pred_region
        %p208 = scmp.lt.s32.totalorder %s12, 1
        %s209 = scalar_select %p208, %s12, 1
        %s210 = smul.addr %s209, 8
        %s211 = scalar_lea.vmem %s0, %s210
      $region36: #{transformer_prediction_forward.10} parent=31 // pred_fallthru
        _
      // Predicated region
      $region37: #{transformer_prediction_forward.10} parent=31 // pred_check
        %p212 = pneg %p142
      $region38: #{transformer_prediction_forward.10} parent=31 // pred_check_branch
        %214 = sbr.rel (%p212) target = $region40
      $region39: #{transformer_prediction_forward.10} parent=31 // pred_region
        %p215 = scmp.lt.s32.totalorder %s12, 1
        %s216 = scalar_select %p215, %s12, 1
        %s217 = scalar_lea.vmem %s5, %s216
      $region40: #{transformer_prediction_forward.10} parent=31 // pred_fallthru
        _
    $region32: #{transformer_prediction_forward.10} parent=5 // pred_fallthru
      _
    %p218 = scmp.le.s32.totalorder 1, %s12
    %p219 = scmp.lt.s32.totalorder %s12, 3
    %p220 = pnand %p218, %p219
    %p221 = pneg %p220
    // Predicated region
    $region41: #{transformer_prediction_forward.10} parent=5 // pred_check
      _
    $region42: #{transformer_prediction_forward.10} parent=5 // pred_check_branch
      %223 = sbr.rel (%p220) target = $region44
    $region43: #{transformer_prediction_forward.10} parent=5 // pred_region
      %s224 = ssub.s32 %s12, 1
      %p225 = scmp.lt.s32.totalorder %s17, 1
      %s226 = scalar_select %p225, %s17, 1
      %s227 = smul.addr %s226, 8
      %s228 = scalar_lea.vmem %s0, %s227
      %p229 = pneg %p38
      %p230 = pneg %p35
      %p231 = pneg %p59
      %p232 = pneg %p56
      %p233 = pneg %p80
      %p234 = pneg %p77
      %p235 = pneg %p101
      %p236 = pneg %p98
      %p237 = pneg %p122
      %p238 = pneg %p119
      %p239 = scmp.lt.s32.totalorder %s17, 1
      %s240 = scalar_select %p239, %s17, 1
      %s241 = scalar_lea.vmem %s5, %s240
      %p242 = pneg %p148
      %p243 = pneg %p145
      %p244 = pneg %p174
      %p245 = pneg %p171
      %p246 = scmp.lt.s32.totalorder %s17, 1
      %s247 = scalar_select %p246, %s17, 1
      %s248 = smul.addr %s247, 8
      %s249 = scalar_lea.vmem %s6, %s248
      %p250 = scmp.lt.s32.totalorder %s17, 1
      %s251 = scalar_select %p250, %s17, 1
      %s252 = smul.addr %s251, 8
      %s253 = scalar_lea.vmem %s0, %s252
      %p254 = scmp.lt.s32.totalorder %s17, 1
      %s255 = scalar_select %p254, %s17, 1
      %s256 = scalar_lea.vmem %s5, %s255
      %p257 = scmp.lt.s32.totalorder %s17, 1
      %s258 = scalar_select %p257, %s17, 1
      %s259 = smul.addr %s258, 8
      %s260 = scalar_lea.vmem %s6, %s259
      %v261 = vld [vmem:[%s253] sm:$0xff]
      %v262 = vld [vmem:[%s1] sm:$0x1]
      %v264 = vperm.slane %v262, 0
      %v266 = vmul.f32 %v261, %v264
      %v267 = vld [vmem:[%s2] sm:$0x1]
      %v269 = vperm.slane %v267, 0
      %v271 = vadd.f32 %v266, %v269
      %v272 = vld [vmem:[%s3] sm:$0xf]
      %v273 = vld [vmem:[%s4] sm:$0x1]
      %v275 = vperm.slane %v273, 0
      %vm277 = vcmask 31744
      %v279 = vsel %vm277, %v271, 0
      %vm281 = vcmask 1043456
      %v283 = vsel %vm281, %v272, 0
      %285 = vmatpush.msra.mxu0 0.0
      %286 = vmatpush.msra.mxu0 0.0
      %287 = vmatpush.msra.mxu0 0.0
      %288 = vmatpush.msra.mxu0 0.0
      %289 = vmatpush.msra.mxu0 0.0
      %290 = vmatpush.msra.mxu0 0.0
      %291 = vmatpush.msra.mxu0 0.0
      %292 = vmatpush.msra.mxu0 0.0
      %293 = vmatpush.msra.mxu0 0.0
      %294 = vmatpush.msra.mxu0 0.0
      %295 = vmatpush.msra.mxu0 0.0
      %296 = vmatpush.msra.mxu0 0.0
      %297 = vmatpush.msra.mxu0 0.0
      %298 = vmatpush.msra.mxu0 0.0
      %299 = vmatpush.msra.mxu0 0.0
      %300 = vmatpush.msra.mxu0 %v283
      %301 = vmatmul.f32.gmra.mxu0 %v279
      %v302 = vpop.f32.mrf.mxu0
      %v303 = vadd.f32 %v275, %v302
      %304 = vdwg.mxu0
      %v305 = vld [vmem:[%s256] sm:$0x1]
      %v307 = vperm.slane %v305, 0
      %v309 = vadd.f32 %v303, %v307
      %vm310 = vcmask 130048
      %311 = vst.msk [vmem:[%s260] sm:$0xff] %vm310, %v309
      %p312 = scmp.lt.s32.totalorder %s17, 1
      %s313 = scalar_select %p312, %s17, 1
      %s314 = smul.addr %s313, 8
      %s315 = scalar_lea.vmem %s6, %s314
      // Predicated region
      $region45: #{transformer_prediction_forward.10} parent=43 // pred_check
        %p316 = pneg %p171
      $region46: #{transformer_prediction_forward.10} parent=43 // pred_check_branch
        %318 = sbr.rel (%p316) target = $region48
      $region47: #{transformer_prediction_forward.10} parent=43 // pred_region
        _
      $region48: #{transformer_prediction_forward.10} parent=43 // pred_fallthru
        _
    $region44: #{transformer_prediction_forward.10} parent=5 // pred_fallthru
      _
    %p319 = scmp.le.s32.totalorder 2, %s12
    // Predicated region
    $region49: #{transformer_prediction_forward.10} parent=5 // pred_check
      %p320 = pneg %p319
    $region50: #{transformer_prediction_forward.10} parent=5 // pred_check_branch
      %322 = sbr.rel (%p320) target = $region52
    $region51: #{transformer_prediction_forward.10} parent=5 // pred_region
      %s323 = ssub.s32 %s12, 2
      // Predicated region
      $region53: #{transformer_prediction_forward.10} parent=51 // pred_check
        %p324 = pneg %p177
      $region54: #{transformer_prediction_forward.10} parent=51 // pred_check_branch
        %326 = sbr.rel (%p324) target = $region56
      $region55: #{transformer_prediction_forward.10} parent=51 // pred_region
        %p327 = scmp.lt.s32.totalorder %s18, 1
        %s328 = scalar_select %p327, %s18, 1
        %s329 = smul.addr %s328, 8
        %s330 = scalar_lea.vmem %s6, %s329
      $region56: #{transformer_prediction_forward.10} parent=51 // pred_fallthru
        _
    $region52: #{transformer_prediction_forward.10} parent=5 // pred_fallthru
      _
  $region6: #{transformer_prediction_forward.10} parent=0 // loop_footer
    %s16 = sadd.s32 1, %s12
  $region7: #{transformer_prediction_forward.10} parent=0 // loop_footer_branch
    %11 = sbr.rel target = $region3
  $region8: #{transformer_prediction_forward.10} parent=0 // loop_exit
    _

// kernel: transformer_prediction_forward.12
$region0: #{transformer_prediction_forward.12}
  #allocation0 [shape = 'u32[]', space=smem, size = 0x4, offset = 0x4, fixed_abs, tag = 'smem constant byte address 0x4 - core index']
  #allocation1 [shape = 'u32[72,128]{1,0:T(1,128)}', space=vmem, size = 0x9000, scoped, tag = 'internal scratch']
  %s0 = inlined_call_operand.vmem [shape: f32[16,8,2], index: 0, kind: input, shape index: {}]
  %s1 = inlined_call_operand.vmem [shape: f32[16,8,2], index: 1, kind: input, shape index: {}]
  %s2 = inlined_call_operand.vmem [shape: f32[16,8,2], index: 2, kind: input, shape index: {}]
  %s3 = inlined_call_operand.vmem [shape: f32[16,8,2], index: 3, kind: output, shape index: {}]
  %s4 = sld [smem:[#allocation0]]
  $region45: #{transformer_prediction_forward.12} parent=0
    _
  %s6 = ssub.s32 1, %s4
  %s7 = scalar_select 0, %s6, %s4
  loop: start=0, step=1, limit=18
  $region2: #{transformer_prediction_forward.12} parent=0 // loop_pre_header
    _
  $region3: #{transformer_prediction_forward.12} parent=0 // loop_header
    %s9 = sphi 0, %s13
    %p10 = scmp.ge.s32.totalorder %s9, 18
    %s19 = sphi 0, %s21
    %s22 = sphi 0, %s19
    %s23 = sphi 0, %s22
    %s39 = sphi 0, %s23
    %s45 = sphi 0, %s47
    %s48 = sphi 0, %s45
    %s49 = sphi 0, %s48
    %s65 = sphi 0, %s49
    %s71 = sphi 0, %s73
    %s74 = sphi 0, %s71
    %s75 = sphi 0, %s74
    %s91 = sphi 0, %s75
    %s97 = sphi 0, %s99
    %s100 = sphi 0, %s97
    %s101 = sphi 0, %s100
    %s117 = sphi 0, %s101
  $region4: #{transformer_prediction_forward.12} parent=0 // loop_header_branch
    %12 = sbr.rel (%p10) target = $region8
  $region5: #{transformer_prediction_forward.12} parent=0 // loop_body
    %s14 = ssub.s32 %s9, 1
    %s15 = ssub.s32 %s9, 2
    %s16 = sadd.s32 %s9, 1
    %s17 = ssub.s32 %s9, %s16
    %p18 = scmp.eq.s32.totalorder %s17, 0
    %s20 = sadd.s32 %s19, 1
    %s21 = scalar_select %p18, %s19, %s20
    %p24 = pneg %p18
    %p25 = scmp.eq.s32.totalorder %s9, 15
    %p26 = por %p24, %p25
    %p27 = scmp.ne.s32.totalorder %s19, %s22
    %p28 = scmp.eq.s32.totalorder %s9, 0
    %p29 = por %p27, %p28
    %p30 = scmp.ne.s32.totalorder %s19, %s22
    %p31 = scmp.eq.s32.totalorder %s14, 15
    %p32 = por %p30, %p31
    %p33 = scmp.ne.s32.totalorder %s22, %s23
    %p34 = scmp.eq.s32.totalorder %s14, 0
    %p35 = por %p33, %p34
    %p36 = scmp.ne.s32.totalorder %s22, %s23
    %p37 = scmp.eq.s32.totalorder %s15, 15
    %p38 = por %p36, %p37
    %p40 = scmp.ne.s32.totalorder %s23, %s39
    %p41 = scmp.eq.s32.totalorder %s15, 0
    %p42 = por %p40, %p41
    %s43 = ssub.s32 %s9, %s16
    %p44 = scmp.eq.s32.totalorder %s43, 0
    %s46 = sadd.s32 %s45, 1
    %s47 = scalar_select %p44, %s45, %s46
    %p50 = pneg %p44
    %p51 = scmp.eq.s32.totalorder %s9, 15
    %p52 = por %p50, %p51
    %p53 = scmp.ne.s32.totalorder %s45, %s48
    %p54 = scmp.eq.s32.totalorder %s9, 0
    %p55 = por %p53, %p54
    %p56 = scmp.ne.s32.totalorder %s45, %s48
    %p57 = scmp.eq.s32.totalorder %s14, 15
    %p58 = por %p56, %p57
    %p59 = scmp.ne.s32.totalorder %s48, %s49
    %p60 = scmp.eq.s32.totalorder %s14, 0
    %p61 = por %p59, %p60
    %p62 = scmp.ne.s32.totalorder %s48, %s49
    %p63 = scmp.eq.s32.totalorder %s15, 15
    %p64 = por %p62, %p63
    %p66 = scmp.ne.s32.totalorder %s49, %s65
    %p67 = scmp.eq.s32.totalorder %s15, 0
    %p68 = por %p66, %p67
    %s69 = ssub.s32 %s9, %s16
    %p70 = scmp.eq.s32.totalorder %s69, 0
    %s72 = sadd.s32 %s71, 1
    %s73 = scalar_select %p70, %s71, %s72
    %p76 = pneg %p70
    %p77 = scmp.eq.s32.totalorder %s9, 15
    %p78 = por %p76, %p77
    %p79 = scmp.ne.s32.totalorder %s71, %s74
    %p80 = scmp.eq.s32.totalorder %s9, 0
    %p81 = por %p79, %p80
    %p82 = scmp.ne.s32.totalorder %s71, %s74
    %p83 = scmp.eq.s32.totalorder %s14, 15
    %p84 = por %p82, %p83
    %p85 = scmp.ne.s32.totalorder %s74, %s75
    %p86 = scmp.eq.s32.totalorder %s14, 0
    %p87 = por %p85, %p86
    %p88 = scmp.ne.s32.totalorder %s74, %s75
    %p89 = scmp.eq.s32.totalorder %s15, 15
    %p90 = por %p88, %p89
    %p92 = scmp.ne.s32.totalorder %s75, %s91
    %p93 = scmp.eq.s32.totalorder %s15, 0
    %p94 = por %p92, %p93
    %s95 = ssub.s32 %s9, %s16
    %p96 = scmp.eq.s32.totalorder %s95, 0
    %s98 = sadd.s32 %s97, 1
    %s99 = scalar_select %p96, %s97, %s98
    %p102 = pneg %p96
    %p103 = scmp.eq.s32.totalorder %s9, 15
    %p104 = por %p102, %p103
    %p105 = scmp.ne.s32.totalorder %s97, %s100
    %p106 = scmp.eq.s32.totalorder %s9, 0
    %p107 = por %p105, %p106
    %p108 = scmp.ne.s32.totalorder %s97, %s100
    %p109 = scmp.eq.s32.totalorder %s14, 15
    %p110 = por %p108, %p109
    %p111 = scmp.ne.s32.totalorder %s100, %s101
    %p112 = scmp.eq.s32.totalorder %s14, 0
    %p113 = por %p111, %p112
    %p114 = scmp.ne.s32.totalorder %s100, %s101
    %p115 = scmp.eq.s32.totalorder %s15, 15
    %p116 = por %p114, %p115
    %p118 = scmp.ne.s32.totalorder %s101, %s117
    %p119 = scmp.eq.s32.totalorder %s15, 0
    %p120 = por %p118, %p119
    %p121 = scmp.le.s32.totalorder 1, %s9
    %p122 = scmp.lt.s32.totalorder %s9, 17
    %p123 = pnand %p121, %p122
    %p124 = pneg %p123
    // Predicated region
    $region9: #{transformer_prediction_forward.12} parent=5 // pred_check
      _
    $region10: #{transformer_prediction_forward.12} parent=5 // pred_check_branch
      %126 = sbr.rel (%p123) target = $region12
    $region11: #{transformer_prediction_forward.12} parent=5 // pred_region
      %s127 = ssub.s32 %s9, 1
    $region12: #{transformer_prediction_forward.12} parent=5 // pred_fallthru
      _
    %p128 = scmp.lt.s32.totalorder %s9, 16
    // Predicated region
    $region13: #{transformer_prediction_forward.12} parent=5 // pred_check
      %p129 = pneg %p128
    $region14: #{transformer_prediction_forward.12} parent=5 // pred_check_branch
      %131 = sbr.rel (%p129) target = $region16
    $region15: #{transformer_prediction_forward.12} parent=5 // pred_region
      // Predicated region
      $region17: #{transformer_prediction_forward.12} parent=15 // pred_check
        %p132 = pneg %p29
      $region18: #{transformer_prediction_forward.12} parent=15 // pred_check_branch
        %134 = sbr.rel (%p132) target = $region20
      $region19: #{transformer_prediction_forward.12} parent=15 // pred_region
        %p135 = scmp.lt.s32.totalorder %s9, 15
        %s136 = scalar_select %p135, %s9, 15
        %s137 = smul.addr %s136, 8
        %s138 = scalar_lea.vmem %s0, %s137
      $region20: #{transformer_prediction_forward.12} parent=15 // pred_fallthru
        _
      // Predicated region
      $region21: #{transformer_prediction_forward.12} parent=15 // pred_check
        %p139 = pneg %p55
      $region22: #{transformer_prediction_forward.12} parent=15 // pred_check_branch
        %141 = sbr.rel (%p139) target = $region24
      $region23: #{transformer_prediction_forward.12} parent=15 // pred_region
        %p142 = scmp.lt.s32.totalorder %s9, 15
        %s143 = scalar_select %p142, %s9, 15
        %s144 = smul.addr %s143, 8
        %s145 = scalar_lea.vmem %s1, %s144
      $region24: #{transformer_prediction_forward.12} parent=15 // pred_fallthru
        _
      // Predicated region
      $region25: #{transformer_prediction_forward.12} parent=15 // pred_check
        %p146 = pneg %p81
      $region26: #{transformer_prediction_forward.12} parent=15 // pred_check_branch
        %148 = sbr.rel (%p146) target = $region28
      $region27: #{transformer_prediction_forward.12} parent=15 // pred_region
        %p149 = scmp.lt.s32.totalorder %s9, 15
        %s150 = scalar_select %p149, %s9, 15
        %s151 = smul.addr %s150, 8
        %s152 = scalar_lea.vmem %s2, %s151
      $region28: #{transformer_prediction_forward.12} parent=15 // pred_fallthru
        _
    $region16: #{transformer_prediction_forward.12} parent=5 // pred_fallthru
      _
    %p153 = scmp.le.s32.totalorder 1, %s9
    %p154 = scmp.lt.s32.totalorder %s9, 17
    %p155 = pnand %p153, %p154
    %p156 = pneg %p155
    // Predicated region
    $region29: #{transformer_prediction_forward.12} parent=5 // pred_check
      _
    $region30: #{transformer_prediction_forward.12} parent=5 // pred_check_branch
      %158 = sbr.rel (%p155) target = $region32
    $region31: #{transformer_prediction_forward.12} parent=5 // pred_region
      %s159 = ssub.s32 %s9, 1
      %p160 = scmp.lt.s32.totalorder %s14, 15
      %s161 = scalar_select %p160, %s14, 15
      %s162 = smul.addr %s161, 8
      %s163 = scalar_lea.vmem %s0, %s162
      %p164 = pneg %p35
      %p165 = pneg %p32
      %p166 = scmp.lt.s32.totalorder %s14, 15
      %s167 = scalar_select %p166, %s14, 15
      %s168 = smul.addr %s167, 8
      %s169 = scalar_lea.vmem %s1, %s168
      %p170 = pneg %p61
      %p171 = pneg %p58
      %p172 = scmp.lt.s32.totalorder %s14, 15
      %s173 = scalar_select %p172, %s14, 15
      %s174 = smul.addr %s173, 8
      %s175 = scalar_lea.vmem %s2, %s174
      %p176 = pneg %p87
      %p177 = pneg %p84
      %p178 = pneg %p113
      %p179 = pneg %p110
      %p180 = scmp.lt.s32.totalorder %s14, 15
      %s181 = scalar_select %p180, %s14, 15
      %s182 = smul.addr %s181, 8
      %s183 = scalar_lea.vmem %s3, %s182
      %p184 = scmp.lt.s32.totalorder %s14, 15
      %s185 = scalar_select %p184, %s14, 15
      %s186 = smul.addr %s185, 8
      %s187 = scalar_lea.vmem %s0, %s186
      %p188 = scmp.lt.s32.totalorder %s14, 15
      %s189 = scalar_select %p188, %s14, 15
      %s190 = smul.addr %s189, 8
      %s191 = scalar_lea.vmem %s1, %s190
      %p192 = scmp.lt.s32.totalorder %s14, 15
      %s193 = scalar_select %p192, %s14, 15
      %s194 = smul.addr %s193, 8
      %s195 = scalar_lea.vmem %s2, %s194
      %p196 = scmp.lt.s32.totalorder %s14, 15
      %s197 = scalar_select %p196, %s14, 15
      %s198 = smul.addr %s197, 8
      %s199 = scalar_lea.vmem %s3, %s198
      %v200 = vld [vmem:[%s187] sm:$0xff]
      %v201 = vld [vmem:[%s191] sm:$0xff]
      %v202 = vld [vmem:[%s195] sm:$0xff]
      %vm203 = vcmask 15360
      %v205 = vsel %vm203, %v200, 0
      %v208 = vsel %vm203, %v201, 0
      %210 = vmatpush.xpose.msra.mxu0 0.0
      %211 = vmatpush.xpose.msra.mxu0 0.0
      %212 = vmatpush.xpose.msra.mxu0 0.0
      %213 = vmatpush.xpose.msra.mxu0 0.0
      %214 = vmatpush.xpose.msra.mxu0 0.0
      %215 = vmatpush.xpose.msra.mxu0 0.0
      %216 = vmatpush.xpose.msra.mxu0 0.0
      %217 = vmatpush.xpose.msra.mxu0 0.0
      %218 = vmatpush.xpose.msra.mxu0 0.0
      %219 = vmatpush.xpose.msra.mxu0 0.0
      %220 = vmatpush.xpose.msra.mxu0 0.0
      %221 = vmatpush.xpose.msra.mxu0 0.0
      %222 = vmatpush.xpose.msra.mxu0 0.0
      %223 = vmatpush.xpose.msra.mxu0 0.0
      %224 = vmatpush.xpose.msra.mxu0 0.0
      %225 = vmatpush.xpose.msra.mxu0 %v208
      %226 = vmatmul.f32.gmra.mxu0 %v205
      %v227 = vpop.f32.mrf.mxu0
      %v228 = vadd.f32 0.0, %v227
      %229 = vdwg.mxu0
      %v230 = vmul.f32 %v228, 0.70710677
      %vm231 = vcmask 64512
      %v232 = vsel %vm231, %v230, -inf
      %233 = vmax.xlane.f32.xlu0 %v232
      %v234 = vpop.xlane.xlu0 %233
      %v235 = vsub.f32 %v230, %v234
      %v236 = vmul.f32 %v235, 1.442695
      %v237 = vpow.pop %v236
      %v238 = vsel %vm231, %v237, 0.0
      %239 = vadd.xlane.f32.xlu0 %v238
      %v240 = vpop.xlane.xlu0 %239
      %v241 = vrcp.pop %v240
      %v242 = vmul.f32 %v240, %v241
      %v243 = vsub.f32 1.0, %v242
      %v244 = vmul.f32 %v241, %v243
      %v245 = vadd.f32 %v241, %v244
      %vm246 = vweird.f32 %v240
      %vm247 = vweird.f32 %v241
      %vm248 = vmor %vm246, %vm247
      %v249 = vsel %vm248, %v241, %v245
      %v250 = vand.u32 2147483647, %v240
      %vm251 = vcmp.eq.f32.partialorder %v250, 8.507059e+37
      %v252 = vand.u32 %v240, 2147483648
      %v253 = vor.u32 1.1754944e-38, %v252
      %v254 = vsel %vm251, %v253, %v249
      %v255 = vmul.f32 %v237, %v254
      %v257 = vsel %vm231, %v255, 0
      %259 = vmatpush.msra.mxu0 0.0
      %260 = vmatpush.msra.mxu0 0.0
      %261 = vmatpush.msra.mxu0 0.0
      %262 = vmatpush.msra.mxu0 0.0
      %263 = vmatpush.msra.mxu0 0.0
      %264 = vmatpush.msra.mxu0 0.0
      %265 = vmatpush.msra.mxu0 0.0
      %266 = vmatpush.msra.mxu0 0.0
      %267 = vmatpush.msra.mxu0 0.0
      %268 = vmatpush.msra.mxu0 0.0
      %269 = vmatpush.msra.mxu0 0.0
      %270 = vmatpush.msra.mxu0 0.0
      %271 = vmatpush.msra.mxu0 0.0
      %272 = vmatpush.msra.mxu0 0.0
      %273 = vmatpush.msra.mxu0 0.0
      %274 = vmatpush.msra.mxu0 %v202
      %275 = vmatmul.f32.gmra.mxu0 %v257
      %v276 = vpop.f32.mrf.mxu0
      %v277 = vadd.f32 0.0, %v276
      %278 = vdwg.mxu0
      %279 = vst.msk [vmem:[%s199] sm:$0xff] %vm203, %v277
      %p280 = scmp.lt.s32.totalorder %s14, 15
      %s281 = scalar_select %p280, %s14, 15
      %s282 = smul.addr %s281, 8
      %s283 = scalar_lea.vmem %s3, %s282
      // Predicated region
      $region33: #{transformer_prediction_forward.12} parent=31 // pred_check
        %p284 = pneg %p110
      $region34: #{transformer_prediction_forward.12} parent=31 // pred_check_branch
        %286 = sbr.rel (%p284) target = $region36
      $region35: #{transformer_prediction_forward.12} parent=31 // pred_region
        _
      $region36: #{transformer_prediction_forward.12} parent=31 // pred_fallthru
        _
    $region32: #{transformer_prediction_forward.12} parent=5 // pred_fallthru
      _
    %p287 = scmp.le.s32.totalorder 2, %s9
    // Predicated region
    $region37: #{transformer_prediction_forward.12} parent=5 // pred_check
      %p288 = pneg %p287
    $region38: #{transformer_prediction_forward.12} parent=5 // pred_check_branch
      %290 = sbr.rel (%p288) target = $region40
    $region39: #{transformer_prediction_forward.12} parent=5 // pred_region
      %s291 = ssub.s32 %s9, 2
      // Predicated region
      $region41: #{transformer_prediction_forward.12} parent=39 // pred_check
        %p292 = pneg %p116
      $region42: #{transformer_prediction_forward.12} parent=39 // pred_check_branch
        %294 = sbr.rel (%p292) target = $region44
      $region43: #{transformer_prediction_forward.12} parent=39 // pred_region
        %p295 = scmp.lt.s32.totalorder %s15, 15
        %s296 = scalar_select %p295, %s15, 15
        %s297 = smul.addr %s296, 8
        %s298 = scalar_lea.vmem %s3, %s297
      $region44: #{transformer_prediction_forward.12} parent=39 // pred_fallthru
        _
    $region40: #{transformer_prediction_forward.12} parent=5 // pred_fallthru
      _
  $region6: #{transformer_prediction_forward.12} parent=0 // loop_footer
    %s13 = sadd.s32 1, %s9
  $region7: #{transformer_prediction_forward.12} parent=0 // loop_footer_branch
    %8 = sbr.rel target = $region3
  $region8: #{transformer_prediction_forward.12} parent=0 // loop_exit
    _

// kernel: transformer_prediction_forward.13
$region0: #{transformer_prediction_forward.13}
  #allocation0 [shape = 'u32[]', space=smem, size = 0x4, offset = 0x4, fixed_abs, tag = 'smem constant byte address 0x4 - core index']
  #allocation1 [shape = 'u32[72,128]{1,0:T(1,128)}', space=vmem, size = 0x9000, scoped, tag = 'internal scratch']
  %s0 = inlined_call_operand.vmem [shape: f32[16,16], index: 0, kind: input, shape index: {}, may-alias: {0,6}]
  %s1 = inlined_call_operand.vmem [shape: f32[16,16], index: 1, kind: input, shape index: {}]
  %s2 = inlined_call_operand.vmem [shape: f32[16,16], index: 2, kind: input, shape index: {}]
  %s3 = inlined_call_operand.vmem [shape: f32[1,16], index: 3, kind: input, shape index: {}]
  %s4 = inlined_call_operand.vmem [shape: f32[1,16], index: 4, kind: input, shape index: {}]
  %s5 = inlined_call_operand.vmem [shape: f32[1,16], index: 5, kind: input, shape index: {}]
  %s6 = inlined_call_operand.vmem [shape: f32[16,16], index: 6, kind: output, shape index: {}, may-alias: {0,6}]
  %s7 = sld [smem:[#allocation0]]
  $region34: #{transformer_prediction_forward.13} parent=0
    _
  %s9 = ssub.s32 1, %s7
  %s10 = scalar_select 0, %s9, %s7
  // Predicated region
  $region2: #{transformer_prediction_forward.13} parent=0 // pred_check
    _
  $region3: #{transformer_prediction_forward.13} parent=0 // pred_check_branch
    %12 = sbr.rel (0) target = $region5
  $region4: #{transformer_prediction_forward.13} parent=0 // pred_region
    _
  $region5: #{transformer_prediction_forward.13} parent=0 // pred_fallthru
    _
  // Predicated region
  $region6: #{transformer_prediction_forward.13} parent=0 // pred_check
    _
  $region7: #{transformer_prediction_forward.13} parent=0 // pred_check_branch
    %14 = sbr.rel (0) target = $region9
  $region8: #{transformer_prediction_forward.13} parent=0 // pred_region
    _
  $region9: #{transformer_prediction_forward.13} parent=0 // pred_fallthru
    _
  // Predicated region
  $region10: #{transformer_prediction_forward.13} parent=0 // pred_check
    _
  $region11: #{transformer_prediction_forward.13} parent=0 // pred_check_branch
    %16 = sbr.rel (0) target = $region13
  $region12: #{transformer_prediction_forward.13} parent=0 // pred_region
    _
  $region13: #{transformer_prediction_forward.13} parent=0 // pred_fallthru
    _
  // Predicated region
  $region14: #{transformer_prediction_forward.13} parent=0 // pred_check
    _
  $region15: #{transformer_prediction_forward.13} parent=0 // pred_check_branch
    %18 = sbr.rel (0) target = $region17
  $region16: #{transformer_prediction_forward.13} parent=0 // pred_region
    _
  $region17: #{transformer_prediction_forward.13} parent=0 // pred_fallthru
    _
  // Predicated region
  $region18: #{transformer_prediction_forward.13} parent=0 // pred_check
    _
  $region19: #{transformer_prediction_forward.13} parent=0 // pred_check_branch
    %20 = sbr.rel (0) target = $region21
  $region20: #{transformer_prediction_forward.13} parent=0 // pred_region
    _
  $region21: #{transformer_prediction_forward.13} parent=0 // pred_fallthru
    _
  // Predicated region
  $region22: #{transformer_prediction_forward.13} parent=0 // pred_check
    _
  $region23: #{transformer_prediction_forward.13} parent=0 // pred_check_branch
    %22 = sbr.rel (0) target = $region25
  $region24: #{transformer_prediction_forward.13} parent=0 // pred_region
    _
  $region25: #{transformer_prediction_forward.13} parent=0 // pred_fallthru
    _
  %v23 = vld [vmem:[%s1] sm:$0xff]
  %v24 = vld [vmem:[%s1 + $0x8] sm:$0xff]
  %v25 = vld [vmem:[%s2] sm:$0xff]
  %v26 = vld [vmem:[%s2 + $0x8] sm:$0xff]
  %v27 = vld [vmem:[%s3] sm:$0x1]
  %v29 = vperm.slane %v27, 0
  %vm31 = vcmask 130048
  %v33 = vsel %vm31, %v23, 0
  %v36 = vsel %vm31, %v24, 0
  %38 = vmatpush.msra.mxu0 0.0
  %39 = vmatpush.msra.mxu0 0.0
  %40 = vmatpush.msra.mxu0 0.0
  %41 = vmatpush.msra.mxu0 0.0
  %42 = vmatpush.msra.mxu0 0.0
  %43 = vmatpush.msra.mxu0 0.0
  %44 = vmatpush.msra.mxu0 0.0
  %45 = vmatpush.msra.mxu0 0.0
  %46 = vmatpush.msra.mxu0 0.0
  %47 = vmatpush.msra.mxu0 0.0
  %48 = vmatpush.msra.mxu0 0.0
  %49 = vmatpush.msra.mxu0 0.0
  %50 = vmatpush.msra.mxu0 0.0
  %51 = vmatpush.msra.mxu0 0.0
  %52 = vmatpush.msra.mxu0 %v26
  %53 = vmatpush.msra.mxu0 %v25
  %54 = vmatmul.f32.gmra.mxu0 %v33
  %v55 = vpop.f32.mrf.mxu0
  %v56 = vadd.f32 %v29, %v55
  %57 = vmatmul.f32.gmra.mxu0 %v36
  %v58 = vpop.f32.mrf.mxu0
  %v59 = vadd.f32 %v29, %v58
  %60 = vdwg.mxu0
  %v61 = vld [vmem:[%s0] sm:$0xff]
  %v62 = vld [vmem:[%s0 + $0x8] sm:$0xff]
  %v63 = vadd.f32 %v61, %v56
  %v64 = vadd.f32 %v62, %v59
  %v65 = vld [vmem:[%s4] sm:$0x1]
  %v66 = vld [vmem:[%s5] sm:$0x1]
  %v67 = vsel %vm31, %v63, 0.0
  %68 = vadd.xlane.f32.xlu0 %v67
  %v69 = vpop.xlane.xlu0 %68
  %v70 = vsel %vm31, %v64, 0.0
  %71 = vadd.xlane.f32.xlu0 %v70
  %v72 = vpop.xlane.xlu0 %71
  %v73 = vrcp.pop 16.0
  %v74 = vmul.f32 16.0, %v73
  %v75 = vsub.f32 1.0, %v74
  %v76 = vmul.f32 %v73, %v75
  %v77 = vadd.f32 %v73, %v76
  %vm78 = vweird.f32 %v73
  %v79 = vsel %vm78, %v73, %v77
  %v80 = vmul.f32 %v69, %v79
  %v81 = vmul.f32 %v72, %v79
  %v82 = vsub.f32 %v63, %v80
  %v83 = vsub.f32 %v64, %v81
  %v84 = vmul.f32 %v82, %v82
  %v85 = vmul.f32 %v83, %v83
  %v86 = vsel %vm31, %v84, 0.0
  %87 = vadd.xlane.f32.xlu0 %v86
  %v88 = vpop.xlane.xlu0 %87
  %v89 = vsel %vm31, %v85, 0.0
  %90 = vadd.xlane.f32.xlu0 %v89
  %v91 = vpop.xlane.xlu0 %90
  %v92 = vmul.f32 %v88, %v79
  %v93 = vmul.f32 %v91, %v79
  %v94 = vadd.f32 %v92, 1e-05
  %v95 = vadd.f32 %v93, 1e-05
  %v96 = vrsqrt.pop %v94
  %v97 = vmul.f32 %v96, %v94
  %v98 = vmul.f32 %v97, %v96
  %v99 = vmul.f32 0.5, %v98
  %v100 = vsub.f32 1.5, %v99
  %v101 = vmul.f32 %v96, %v100
  %vm102 = vweird.f32 %v94
  %vm103 = vweird.f32 %v96
  %vm104 = vmor %vm102, %vm103
  %v105 = vsel %vm104, %v96, %v101
  %v106 = vrsqrt.pop %v95
  %v107 = vmul.f32 %v106, %v95
  %v108 = vmul.f32 %v107, %v106
  %v109 = vmul.f32 0.5, %v108
  %v110 = vsub.f32 1.5, %v109
  %v111 = vmul.f32 %v106, %v110
  %vm112 = vweird.f32 %v95
  %vm113 = vweird.f32 %v106
  %vm114 = vmor %vm112, %vm113
  %v115 = vsel %vm114, %v106, %v111
  %v116 = vmul.f32 %v82, %v105
  %v117 = vmul.f32 %v83, %v115
  %v119 = vperm.slane %v65, 0
  %v121 = vmul.f32 %v116, %v119
  %v122 = vmul.f32 %v117, %v119
  %v124 = vperm.slane %v66, 0
  %v126 = vadd.f32 %v121, %v124
  %v127 = vadd.f32 %v122, %v124
  %128 = vst.msk [vmem:[%s6] sm:$0xff] %vm31, %v126
  %129 = vst.msk [vmem:[%s6 + $0x8] sm:$0xff] %vm31, %v127
  // Predicated region
  $region26: #{transformer_prediction_forward.13} parent=0 // pred_check
    _
  $region27: #{transformer_prediction_forward.13} parent=0 // pred_check_branch
    %131 = sbr.rel (0) target = $region29
  $region28: #{transformer_prediction_forward.13} parent=0 // pred_region
    _
  $region29: #{transformer_prediction_forward.13} parent=0 // pred_fallthru
    _
  // Predicated region
  $region30: #{transformer_prediction_forward.13} parent=0 // pred_check
    _
  $region31: #{transformer_prediction_forward.13} parent=0 // pred_check_branch
    %133 = sbr.rel (0) target = $region33
  $region32: #{transformer_prediction_forward.13} parent=0 // pred_region
    _
  $region33: #{transformer_prediction_forward.13} parent=0 // pred_fallthru
    _

// kernel: transformer_prediction_forward.19
$region0: #{transformer_prediction_forward.19}
  #allocation0 [shape = 'u32[]', space=smem, size = 0x4, offset = 0x4, fixed_abs, tag = 'smem constant byte address 0x4 - core index']
  #allocation1 [shape = 'u32[72,128]{1,0:T(1,128)}', space=vmem, size = 0x9000, scoped, tag = 'internal scratch']
  %s0 = inlined_call_operand.vmem [shape: f32[16,16], index: 0, kind: input, shape index: {}]
  %s1 = inlined_call_operand.vmem [shape: f32[16,3], index: 1, kind: input, shape index: {}]
  %s2 = inlined_call_operand.vmem [shape: f32[1,3], index: 2, kind: input, shape index: {}]
  %s3 = inlined_call_operand.vmem [shape: f32[16,3], index: 3, kind: output, shape index: {}]
  %s4 = sld [smem:[#allocation0]]
  $region22: #{transformer_prediction_forward.19} parent=0
    _
  %s6 = ssub.s32 1, %s4
  %s7 = scalar_select 0, %s6, %s4
  // Predicated region
  $region2: #{transformer_prediction_forward.19} parent=0 // pred_check
    _
  $region3: #{transformer_prediction_forward.19} parent=0 // pred_check_branch
    %9 = sbr.rel (0) target = $region5
  $region4: #{transformer_prediction_forward.19} parent=0 // pred_region
    _
  $region5: #{transformer_prediction_forward.19} parent=0 // pred_fallthru
    _
  // Predicated region
  $region6: #{transformer_prediction_forward.19} parent=0 // pred_check
    _
  $region7: #{transformer_prediction_forward.19} parent=0 // pred_check_branch
    %11 = sbr.rel (0) target = $region9
  $region8: #{transformer_prediction_forward.19} parent=0 // pred_region
    _
  $region9: #{transformer_prediction_forward.19} parent=0 // pred_fallthru
    _
  // Predicated region
  $region10: #{transformer_prediction_forward.19} parent=0 // pred_check
    _
  $region11: #{transformer_prediction_forward.19} parent=0 // pred_check_branch
    %13 = sbr.rel (0) target = $region13
  $region12: #{transformer_prediction_forward.19} parent=0 // pred_region
    _
  $region13: #{transformer_prediction_forward.19} parent=0 // pred_fallthru
    _
  %v14 = vld [vmem:[%s0] sm:$0xff]
  %v15 = vld [vmem:[%s0 + $0x8] sm:$0xff]
  %v16 = vld [vmem:[%s1] sm:$0xff]
  %v17 = vld [vmem:[%s1 + $0x8] sm:$0xff]
  %v18 = vld [vmem:[%s2] sm:$0x1]
  %v20 = vperm.slane %v18, 0
  %vm22 = vcmask 130048
  %v24 = vsel %vm22, %v14, 0
  %v27 = vsel %vm22, %v15, 0
  %29 = vmatpush.msra.mxu0 0.0
  %30 = vmatpush.msra.mxu0 0.0
  %31 = vmatpush.msra.mxu0 0.0
  %32 = vmatpush.msra.mxu0 0.0
  %33 = vmatpush.msra.mxu0 0.0
  %34 = vmatpush.msra.mxu0 0.0
  %35 = vmatpush.msra.mxu0 0.0
  %36 = vmatpush.msra.mxu0 0.0
  %37 = vmatpush.msra.mxu0 0.0
  %38 = vmatpush.msra.mxu0 0.0
  %39 = vmatpush.msra.mxu0 0.0
  %40 = vmatpush.msra.mxu0 0.0
  %41 = vmatpush.msra.mxu0 0.0
  %42 = vmatpush.msra.mxu0 0.0
  %43 = vmatpush.msra.mxu0 %v17
  %44 = vmatpush.msra.mxu0 %v16
  %45 = vmatmul.f32.gmra.mxu0 %v24
  %v46 = vpop.f32.mrf.mxu0
  %v47 = vadd.f32 %v20, %v46
  %48 = vmatmul.f32.gmra.mxu0 %v27
  %v49 = vpop.f32.mrf.mxu0
  %v50 = vadd.f32 %v20, %v49
  %51 = vdwg.mxu0
  %vm52 = vcmask 23552
  %53 = vst.msk [vmem:[%s3] sm:$0xff] %vm52, %v47
  %54 = vst.msk [vmem:[%s3 + $0x8] sm:$0xff] %vm52, %v50
  // Predicated region
  $region14: #{transformer_prediction_forward.19} parent=0 // pred_check
    _
  $region15: #{transformer_prediction_forward.19} parent=0 // pred_check_branch
    %56 = sbr.rel (0) target = $region17
  $region16: #{transformer_prediction_forward.19} parent=0 // pred_region
    _
  $region17: #{transformer_prediction_forward.19} parent=0 // pred_fallthru
    _
  // Predicated region
  $region18: #{transformer_prediction_forward.19} parent=0 // pred_check
    _
  $region19: #{transformer_prediction_forward.19} parent=0 // pred_check_branch
    %58 = sbr.rel (0) target = $region21
  $region20: #{transformer_prediction_forward.19} parent=0 // pred_region
    _
  $region21: #{transformer_prediction_forward.19} parent=0 // pred_fallthru
    _

// kernel: transformer_prediction_forward.14
$region0: #{transformer_prediction_forward.14}
  #allocation0 [shape = 'u32[]', space=smem, size = 0x4, offset = 0x4, fixed_abs, tag = 'smem constant byte address 0x4 - core index']
  #allocation1 [shape = 'u32[72,128]{1,0:T(1,128)}', space=vmem, size = 0x9000, scoped, tag = 'internal scratch']
  %s0 = inlined_call_operand.vmem [shape: f32[16,16], index: 0, kind: input, shape index: {}, may-alias: {0,7}]
  %s1 = inlined_call_operand.vmem [shape: f32[16,1000], index: 1, kind: input, shape index: {}]
  %s2 = inlined_call_operand.vmem [shape: f32[1,1000], index: 2, kind: input, shape index: {}]
  %s3 = inlined_call_operand.vmem [shape: f32[1000,16], index: 3, kind: input, shape index: {}]
  %s4 = inlined_call_operand.vmem [shape: f32[1,16], index: 4, kind: input, shape index: {}]
  %s5 = inlined_call_operand.vmem [shape: f32[1,16], index: 5, kind: input, shape index: {}]
  %s6 = inlined_call_operand.vmem [shape: f32[1,16], index: 6, kind: input, shape index: {}]
  %s7 = inlined_call_operand.vmem [shape: f32[16,16], index: 7, kind: output, shape index: {}, may-alias: {0,7}]
  %s8 = sld [smem:[#allocation0]]
  $region38: #{transformer_prediction_forward.14} parent=0
    _
  %s10 = ssub.s32 1, %s8
  %s11 = scalar_select 0, %s10, %s8
  // Predicated region
  $region2: #{transformer_prediction_forward.14} parent=0 // pred_check
    _
  $region3: #{transformer_prediction_forward.14} parent=0 // pred_check_branch
    %13 = sbr.rel (0) target = $region5
  $region4: #{transformer_prediction_forward.14} parent=0 // pred_region
    _
  $region5: #{transformer_prediction_forward.14} parent=0 // pred_fallthru
    _
  // Predicated region
  $region6: #{transformer_prediction_forward.14} parent=0 // pred_check
    _
  $region7: #{transformer_prediction_forward.14} parent=0 // pred_check_branch
    %15 = sbr.rel (0) target = $region9
  $region8: #{transformer_prediction_forward.14} parent=0 // pred_region
    _
  $region9: #{transformer_prediction_forward.14} parent=0 // pred_fallthru
    _
  // Predicated region
  $region10: #{transformer_prediction_forward.14} parent=0 // pred_check
    _
  $region11: #{transformer_prediction_forward.14} parent=0 // pred_check_branch
    %17 = sbr.rel (0) target = $region13
  $region12: #{transformer_prediction_forward.14} parent=0 // pred_region
    _
  $region13: #{transformer_prediction_forward.14} parent=0 // pred_fallthru
    _
  // Predicated region
  $region14: #{transformer_prediction_forward.14} parent=0 // pred_check
    _
  $region15: #{transformer_prediction_forward.14} parent=0 // pred_check_branch
    %19 = sbr.rel (0) target = $region17
  $region16: #{transformer_prediction_forward.14} parent=0 // pred_region
    _
  $region17: #{transformer_prediction_forward.14} parent=0 // pred_fallthru
    _
  // Predicated region
  $region18: #{transformer_prediction_forward.14} parent=0 // pred_check
    _
  $region19: #{transformer_prediction_forward.14} parent=0 // pred_check_branch
    %21 = sbr.rel (0) target = $region21
  $region20: #{transformer_prediction_forward.14} parent=0 // pred_region
    _
  $region21: #{transformer_prediction_forward.14} parent=0 // pred_fallthru
    _
  // Predicated region
  $region22: #{transformer_prediction_forward.14} parent=0 // pred_check
    _
  $region23: #{transformer_prediction_forward.14} parent=0 // pred_check_branch
    %23 = sbr.rel (0) target = $region25
  $region24: #{transformer_prediction_forward.14} parent=0 // pred_region
    _
  $region25: #{transformer_prediction_forward.14} parent=0 // pred_fallthru
    _
  // Predicated region
  $region26: #{transformer_prediction_forward.14} parent=0 // pred_check
    _
  $region27: #{transformer_prediction_forward.14} parent=0 // pred_check_branch
    %25 = sbr.rel (0) target = $region29
  $region28: #{transformer_prediction_forward.14} parent=0 // pred_region
    _
  $region29: #{transformer_prediction_forward.14} parent=0 // pred_fallthru
    _
  %v26 = vld [vmem:[%s0] sm:$0xff]
  %v27 = vld [vmem:[%s0 + $0x8] sm:$0xff]
  %v28 = vld [vmem:[%s1] sm:$0xff]
  %v29 = vld [vmem:[%s1 + $0x8] sm:$0xff]
  %v30 = vld [vmem:[%s1 + $0x10] sm:$0xff]
  %v31 = vld [vmem:[%s1 + $0x18] sm:$0xff]
  %v32 = vld [vmem:[%s1 + $0x20] sm:$0xff]
  %v33 = vld [vmem:[%s1 + $0x28] sm:$0xff]
  %v34 = vld [vmem:[%s1 + $0x30] sm:$0xff]
  %v35 = vld [vmem:[%s1 + $0x38] sm:$0xff]
  %v36 = vld [vmem:[%s1 + $0x40] sm:$0xff]
  %v37 = vld [vmem:[%s1 + $0x48] sm:$0xff]
  %v38 = vld [vmem:[%s1 + $0x50] sm:$0xff]
  %v39 = vld [vmem:[%s1 + $0x58] sm:$0xff]
  %v40 = vld [vmem:[%s1 + $0x60] sm:$0xff]
  %v41 = vld [vmem:[%s1 + $0x68] sm:$0xff]
  %v42 = vld [vmem:[%s1 + $0x70] sm:$0xff]
  %v43 = vld [vmem:[%s1 + $0x78] sm:$0xff]
  %v44 = vld [vmem:[%s2] sm:$0xff]
  %v46 = vperm.slane %v44, 0
  %v47 = vperm.slane %v44, 1
  %v48 = vperm.slane %v44, 2
  %v49 = vperm.slane %v44, 3
  %v50 = vperm.slane %v44, 4
  %v51 = vperm.slane %v44, 5
  %v52 = vperm.slane %v44, 6
  %v53 = vperm.slane %v44, 7
  %vm62 = vcmask 130048
  %v64 = vsel %vm62, %v26, 0
  %v67 = vsel %vm62, %v27, 0
  %69 = vmatpush.msra.mxu0 0.0
  %70 = vmatpush.msra.mxu0 0.0
  %71 = vmatpush.msra.mxu0 0.0
  %72 = vmatpush.msra.mxu0 0.0
  %73 = vmatpush.msra.mxu0 0.0
  %74 = vmatpush.msra.mxu0 0.0
  %75 = vmatpush.msra.mxu0 0.0
  %76 = vmatpush.msra.mxu0 0.0
  %77 = vmatpush.msra.mxu0 0.0
  %78 = vmatpush.msra.mxu0 0.0
  %79 = vmatpush.msra.mxu0 0.0
  %80 = vmatpush.msra.mxu0 0.0
  %81 = vmatpush.msra.mxu0 0.0
  %82 = vmatpush.msra.mxu0 0.0
  %83 = vmatpush.msra.mxu0 %v36
  %84 = vmatpush.msra.mxu0 %v28
  %85 = vmatmul.f32.gmra.mxu0 %v64
  %v86 = vpop.f32.mrf.mxu0
  %v87 = vadd.f32 %v46, %v86
  %88 = vmatmul.f32.gmra.mxu0 %v67
  %v89 = vpop.f32.mrf.mxu0
  %v90 = vadd.f32 %v46, %v89
  %91 = vdwg.mxu0
  %92 = vmatpush.msra.mxu0 0.0
  %93 = vmatpush.msra.mxu0 0.0
  %94 = vmatpush.msra.mxu0 0.0
  %95 = vmatpush.msra.mxu0 0.0
  %96 = vmatpush.msra.mxu0 0.0
  %97 = vmatpush.msra.mxu0 0.0
  %98 = vmatpush.msra.mxu0 0.0
  %99 = vmatpush.msra.mxu0 0.0
  %100 = vmatpush.msra.mxu0 0.0
  %101 = vmatpush.msra.mxu0 0.0
  %102 = vmatpush.msra.mxu0 0.0
  %103 = vmatpush.msra.mxu0 0.0
  %104 = vmatpush.msra.mxu0 0.0
  %105 = vmatpush.msra.mxu0 0.0
  %106 = vmatpush.msra.mxu0 %v37
  %107 = vmatpush.msra.mxu0 %v29
  %108 = vmatmul.f32.gmra.mxu0 %v64
  %v109 = vpop.f32.mrf.mxu0
  %v110 = vadd.f32 %v47, %v109
  %111 = vmatmul.f32.gmra.mxu0 %v67
  %v112 = vpop.f32.mrf.mxu0
  %v113 = vadd.f32 %v47, %v112
  %114 = vdwg.mxu0
  %115 = vmatpush.msra.mxu0 0.0
  %116 = vmatpush.msra.mxu0 0.0
  %117 = vmatpush.msra.mxu0 0.0
  %118 = vmatpush.msra.mxu0 0.0
  %119 = vmatpush.msra.mxu0 0.0
  %120 = vmatpush.msra.mxu0 0.0
  %121 = vmatpush.msra.mxu0 0.0
  %122 = vmatpush.msra.mxu0 0.0
  %123 = vmatpush.msra.mxu0 0.0
  %124 = vmatpush.msra.mxu0 0.0
  %125 = vmatpush.msra.mxu0 0.0
  %126 = vmatpush.msra.mxu0 0.0
  %127 = vmatpush.msra.mxu0 0.0
  %128 = vmatpush.msra.mxu0 0.0
  %129 = vmatpush.msra.mxu0 %v38
  %130 = vmatpush.msra.mxu0 %v30
  %131 = vmatmul.f32.gmra.mxu0 %v64
  %v132 = vpop.f32.mrf.mxu0
  %v133 = vadd.f32 %v48, %v132
  %134 = vmatmul.f32.gmra.mxu0 %v67
  %v135 = vpop.f32.mrf.mxu0
  %v136 = vadd.f32 %v48, %v135
  %137 = vdwg.mxu0
  %138 = vmatpush.msra.mxu0 0.0
  %139 = vmatpush.msra.mxu0 0.0
  %140 = vmatpush.msra.mxu0 0.0
  %141 = vmatpush.msra.mxu0 0.0
  %142 = vmatpush.msra.mxu0 0.0
  %143 = vmatpush.msra.mxu0 0.0
  %144 = vmatpush.msra.mxu0 0.0
  %145 = vmatpush.msra.mxu0 0.0
  %146 = vmatpush.msra.mxu0 0.0
  %147 = vmatpush.msra.mxu0 0.0
  %148 = vmatpush.msra.mxu0 0.0
  %149 = vmatpush.msra.mxu0 0.0
  %150 = vmatpush.msra.mxu0 0.0
  %151 = vmatpush.msra.mxu0 0.0
  %152 = vmatpush.msra.mxu0 %v39
  %153 = vmatpush.msra.mxu0 %v31
  %154 = vmatmul.f32.gmra.mxu0 %v64
  %v155 = vpop.f32.mrf.mxu0
  %v156 = vadd.f32 %v49, %v155
  %157 = vmatmul.f32.gmra.mxu0 %v67
  %v158 = vpop.f32.mrf.mxu0
  %v159 = vadd.f32 %v49, %v158
  %160 = vdwg.mxu0
  %161 = vmatpush.msra.mxu0 0.0
  %162 = vmatpush.msra.mxu0 0.0
  %163 = vmatpush.msra.mxu0 0.0
  %164 = vmatpush.msra.mxu0 0.0
  %165 = vmatpush.msra.mxu0 0.0
  %166 = vmatpush.msra.mxu0 0.0
  %167 = vmatpush.msra.mxu0 0.0
  %168 = vmatpush.msra.mxu0 0.0
  %169 = vmatpush.msra.mxu0 0.0
  %170 = vmatpush.msra.mxu0 0.0
  %171 = vmatpush.msra.mxu0 0.0
  %172 = vmatpush.msra.mxu0 0.0
  %173 = vmatpush.msra.mxu0 0.0
  %174 = vmatpush.msra.mxu0 0.0
  %175 = vmatpush.msra.mxu0 %v40
  %176 = vmatpush.msra.mxu0 %v32
  %177 = vmatmul.f32.gmra.mxu0 %v64
  %v178 = vpop.f32.mrf.mxu0
  %v179 = vadd.f32 %v50, %v178
  %180 = vmatmul.f32.gmra.mxu0 %v67
  %v181 = vpop.f32.mrf.mxu0
  %v182 = vadd.f32 %v50, %v181
  %183 = vdwg.mxu0
  %184 = vmatpush.msra.mxu0 0.0
  %185 = vmatpush.msra.mxu0 0.0
  %186 = vmatpush.msra.mxu0 0.0
  %187 = vmatpush.msra.mxu0 0.0
  %188 = vmatpush.msra.mxu0 0.0
  %189 = vmatpush.msra.mxu0 0.0
  %190 = vmatpush.msra.mxu0 0.0
  %191 = vmatpush.msra.mxu0 0.0
  %192 = vmatpush.msra.mxu0 0.0
  %193 = vmatpush.msra.mxu0 0.0
  %194 = vmatpush.msra.mxu0 0.0
  %195 = vmatpush.msra.mxu0 0.0
  %196 = vmatpush.msra.mxu0 0.0
  %197 = vmatpush.msra.mxu0 0.0
  %198 = vmatpush.msra.mxu0 %v41
  %199 = vmatpush.msra.mxu0 %v33
  %200 = vmatmul.f32.gmra.mxu0 %v64
  %v201 = vpop.f32.mrf.mxu0
  %v202 = vadd.f32 %v51, %v201
  %203 = vmatmul.f32.gmra.mxu0 %v67
  %v204 = vpop.f32.mrf.mxu0
  %v205 = vadd.f32 %v51, %v204
  %206 = vdwg.mxu0
  %207 = vmatpush.msra.mxu0 0.0
  %208 = vmatpush.msra.mxu0 0.0
  %209 = vmatpush.msra.mxu0 0.0
  %210 = vmatpush.msra.mxu0 0.0
  %211 = vmatpush.msra.mxu0 0.0
  %212 = vmatpush.msra.mxu0 0.0
  %213 = vmatpush.msra.mxu0 0.0
  %214 = vmatpush.msra.mxu0 0.0
  %215 = vmatpush.msra.mxu0 0.0
  %216 = vmatpush.msra.mxu0 0.0
  %217 = vmatpush.msra.mxu0 0.0
  %218 = vmatpush.msra.mxu0 0.0
  %219 = vmatpush.msra.mxu0 0.0
  %220 = vmatpush.msra.mxu0 0.0
  %221 = vmatpush.msra.mxu0 %v42
  %222 = vmatpush.msra.mxu0 %v34
  %223 = vmatmul.f32.gmra.mxu0 %v64
  %v224 = vpop.f32.mrf.mxu0
  %v225 = vadd.f32 %v52, %v224
  %226 = vmatmul.f32.gmra.mxu0 %v67
  %v227 = vpop.f32.mrf.mxu0
  %v228 = vadd.f32 %v52, %v227
  %229 = vdwg.mxu0
  %230 = vmatpush.msra.mxu0 0.0
  %231 = vmatpush.msra.mxu0 0.0
  %232 = vmatpush.msra.mxu0 0.0
  %233 = vmatpush.msra.mxu0 0.0
  %234 = vmatpush.msra.mxu0 0.0
  %235 = vmatpush.msra.mxu0 0.0
  %236 = vmatpush.msra.mxu0 0.0
  %237 = vmatpush.msra.mxu0 0.0
  %238 = vmatpush.msra.mxu0 0.0
  %239 = vmatpush.msra.mxu0 0.0
  %240 = vmatpush.msra.mxu0 0.0
  %241 = vmatpush.msra.mxu0 0.0
  %242 = vmatpush.msra.mxu0 0.0
  %243 = vmatpush.msra.mxu0 0.0
  %244 = vmatpush.msra.mxu0 %v43
  %245 = vmatpush.msra.mxu0 %v35
  %246 = vmatmul.f32.gmra.mxu0 %v64
  %v247 = vpop.f32.mrf.mxu0
  %v248 = vadd.f32 %v53, %v247
  %249 = vmatmul.f32.gmra.mxu0 %v67
  %v250 = vpop.f32.mrf.mxu0
  %v251 = vadd.f32 %v53, %v250
  %252 = vdwg.mxu0
  %v253 = vmax.f32 %v87, 0.0
  %v254 = vmax.f32 %v110, 0.0
  %v255 = vmax.f32 %v133, 0.0
  %v256 = vmax.f32 %v156, 0.0
  %v257 = vmax.f32 %v179, 0.0
  %v258 = vmax.f32 %v202, 0.0
  %v259 = vmax.f32 %v225, 0.0
  %v260 = vmax.f32 %v248, 0.0
  %v261 = vmax.f32 %v90, 0.0
  %v262 = vmax.f32 %v113, 0.0
  %v263 = vmax.f32 %v136, 0.0
  %v264 = vmax.f32 %v159, 0.0
  %v265 = vmax.f32 %v182, 0.0
  %v266 = vmax.f32 %v205, 0.0
  %v267 = vmax.f32 %v228, 0.0
  %v268 = vmax.f32 %v251, 0.0
  %v269 = vld [vmem:[%s3] sm:$0xff]
  %v270 = vld [vmem:[%s3 + $0x8] sm:$0xff]
  %v271 = vld [vmem:[%s3 + $0x10] sm:$0xff]
  %v272 = vld [vmem:[%s3 + $0x18] sm:$0xff]
  %v273 = vld [vmem:[%s3 + $0x20] sm:$0xff]
  %v274 = vld [vmem:[%s3 + $0x28] sm:$0xff]
  %v275 = vld [vmem:[%s3 + $0x30] sm:$0xff]
  %v276 = vld [vmem:[%s3 + $0x38] sm:$0xff]
  %v277 = vld [vmem:[%s3 + $0x40] sm:$0xff]
  %v278 = vld [vmem:[%s3 + $0x48] sm:$0xff]
  %v279 = vld [vmem:[%s3 + $0x50] sm:$0xff]
  %v280 = vld [vmem:[%s3 + $0x58] sm:$0xff]
  %v281 = vld [vmem:[%s3 + $0x60] sm:$0xff]
  %v282 = vld [vmem:[%s3 + $0x68] sm:$0xff]
  %v283 = vld [vmem:[%s3 + $0x70] sm:$0xff]
  %v284 = vld [vmem:[%s3 + $0x78] sm:$0xff]
  %v285 = vld [vmem:[%s3 + $0x80] sm:$0xff]
  %v286 = vld [vmem:[%s3 + $0x88] sm:$0xff]
  %v287 = vld [vmem:[%s3 + $0x90] sm:$0xff]
  %v288 = vld [vmem:[%s3 + $0x98] sm:$0xff]
  %v289 = vld [vmem:[%s3 + $0xa0] sm:$0xff]
  %v290 = vld [vmem:[%s3 + $0xa8] sm:$0xff]
  %v291 = vld [vmem:[%s3 + $0xb0] sm:$0xff]
  %v292 = vld [vmem:[%s3 + $0xb8] sm:$0xff]
  %v293 = vld [vmem:[%s3 + $0xc0] sm:$0xff]
  %v294 = vld [vmem:[%s3 + $0xc8] sm:$0xff]
  %v295 = vld [vmem:[%s3 + $0xd0] sm:$0xff]
  %v296 = vld [vmem:[%s3 + $0xd8] sm:$0xff]
  %v297 = vld [vmem:[%s3 + $0xe0] sm:$0xff]
  %v298 = vld [vmem:[%s3 + $0xe8] sm:$0xff]
  %v299 = vld [vmem:[%s3 + $0xf0] sm:$0xff]
  %v300 = vld [vmem:[%s3 + $0xf8] sm:$0xff]
  %v301 = vld [vmem:[%s3 + $0x100] sm:$0xff]
  %v302 = vld [vmem:[%s3 + $0x108] sm:$0xff]
  %v303 = vld [vmem:[%s3 + $0x110] sm:$0xff]
  %v304 = vld [vmem:[%s3 + $0x118] sm:$0xff]
  %v305 = vld [vmem:[%s3 + $0x120] sm:$0xff]
  %v306 = vld [vmem:[%s3 + $0x128] sm:$0xff]
  %v307 = vld [vmem:[%s3 + $0x130] sm:$0xff]
  %v308 = vld [vmem:[%s3 + $0x138] sm:$0xff]
  %v309 = vld [vmem:[%s3 + $0x140] sm:$0xff]
  %v310 = vld [vmem:[%s3 + $0x148] sm:$0xff]
  %v311 = vld [vmem:[%s3 + $0x150] sm:$0xff]
  %v312 = vld [vmem:[%s3 + $0x158] sm:$0xff]
  %v313 = vld [vmem:[%s3 + $0x160] sm:$0xff]
  %v314 = vld [vmem:[%s3 + $0x168] sm:$0xff]
  %v315 = vld [vmem:[%s3 + $0x170] sm:$0xff]
  %v316 = vld [vmem:[%s3 + $0x178] sm:$0xff]
  %v317 = vld [vmem:[%s3 + $0x180] sm:$0xff]
  %v318 = vld [vmem:[%s3 + $0x188] sm:$0xff]
  %v319 = vld [vmem:[%s3 + $0x190] sm:$0xff]
  %v320 = vld [vmem:[%s3 + $0x198] sm:$0xff]
  %v321 = vld [vmem:[%s3 + $0x1a0] sm:$0xff]
  %v322 = vld [vmem:[%s3 + $0x1a8] sm:$0xff]
  %v323 = vld [vmem:[%s3 + $0x1b0] sm:$0xff]
  %v324 = vld [vmem:[%s3 + $0x1b8] sm:$0xff]
  %v325 = vld [vmem:[%s3 + $0x1c0] sm:$0xff]
  %v326 = vld [vmem:[%s3 + $0x1c8] sm:$0xff]
  %v327 = vld [vmem:[%s3 + $0x1d0] sm:$0xff]
  %v328 = vld [vmem:[%s3 + $0x1d8] sm:$0xff]
  %v329 = vld [vmem:[%s3 + $0x1e0] sm:$0xff]
  %v330 = vld [vmem:[%s3 + $0x1e8] sm:$0xff]
  %v331 = vld [vmem:[%s3 + $0x1f0] sm:$0xff]
  %v332 = vld [vmem:[%s3 + $0x1f8] sm:$0xff]
  %v333 = vld [vmem:[%s3 + $0x200] sm:$0xff]
  %v334 = vld [vmem:[%s3 + $0x208] sm:$0xff]
  %v335 = vld [vmem:[%s3 + $0x210] sm:$0xff]
  %v336 = vld [vmem:[%s3 + $0x218] sm:$0xff]
  %v337 = vld [vmem:[%s3 + $0x220] sm:$0xff]
  %v338 = vld [vmem:[%s3 + $0x228] sm:$0xff]
  %v339 = vld [vmem:[%s3 + $0x230] sm:$0xff]
  %v340 = vld [vmem:[%s3 + $0x238] sm:$0xff]
  %v341 = vld [vmem:[%s3 + $0x240] sm:$0xff]
  %v342 = vld [vmem:[%s3 + $0x248] sm:$0xff]
  %v343 = vld [vmem:[%s3 + $0x250] sm:$0xff]
  %v344 = vld [vmem:[%s3 + $0x258] sm:$0xff]
  %v345 = vld [vmem:[%s3 + $0x260] sm:$0xff]
  %v346 = vld [vmem:[%s3 + $0x268] sm:$0xff]
  %v347 = vld [vmem:[%s3 + $0x270] sm:$0xff]
  %v348 = vld [vmem:[%s3 + $0x278] sm:$0xff]
  %v349 = vld [vmem:[%s3 + $0x280] sm:$0xff]
  %v350 = vld [vmem:[%s3 + $0x288] sm:$0xff]
  %v351 = vld [vmem:[%s3 + $0x290] sm:$0xff]
  %v352 = vld [vmem:[%s3 + $0x298] sm:$0xff]
  %v353 = vld [vmem:[%s3 + $0x2a0] sm:$0xff]
  %v354 = vld [vmem:[%s3 + $0x2a8] sm:$0xff]
  %v355 = vld [vmem:[%s3 + $0x2b0] sm:$0xff]
  %v356 = vld [vmem:[%s3 + $0x2b8] sm:$0xff]
  %v357 = vld [vmem:[%s3 + $0x2c0] sm:$0xff]
  %v358 = vld [vmem:[%s3 + $0x2c8] sm:$0xff]
  %v359 = vld [vmem:[%s3 + $0x2d0] sm:$0xff]
  %v360 = vld [vmem:[%s3 + $0x2d8] sm:$0xff]
  %v361 = vld [vmem:[%s3 + $0x2e0] sm:$0xff]
  %v362 = vld [vmem:[%s3 + $0x2e8] sm:$0xff]
  %v363 = vld [vmem:[%s3 + $0x2f0] sm:$0xff]
  %v364 = vld [vmem:[%s3 + $0x2f8] sm:$0xff]
  %v365 = vld [vmem:[%s3 + $0x300] sm:$0xff]
  %v366 = vld [vmem:[%s3 + $0x308] sm:$0xff]
  %v367 = vld [vmem:[%s3 + $0x310] sm:$0xff]
  %v368 = vld [vmem:[%s3 + $0x318] sm:$0xff]
  %v369 = vld [vmem:[%s3 + $0x320] sm:$0xff]
  %v370 = vld [vmem:[%s3 + $0x328] sm:$0xff]
  %v371 = vld [vmem:[%s3 + $0x330] sm:$0xff]
  %v372 = vld [vmem:[%s3 + $0x338] sm:$0xff]
  %v373 = vld [vmem:[%s3 + $0x340] sm:$0xff]
  %v374 = vld [vmem:[%s3 + $0x348] sm:$0xff]
  %v375 = vld [vmem:[%s3 + $0x350] sm:$0xff]
  %v376 = vld [vmem:[%s3 + $0x358] sm:$0xff]
  %v377 = vld [vmem:[%s3 + $0x360] sm:$0xff]
  %v378 = vld [vmem:[%s3 + $0x368] sm:$0xff]
  %v379 = vld [vmem:[%s3 + $0x370] sm:$0xff]
  %v380 = vld [vmem:[%s3 + $0x378] sm:$0xff]
  %v381 = vld [vmem:[%s3 + $0x380] sm:$0xff]
  %v382 = vld [vmem:[%s3 + $0x388] sm:$0xff]
  %v383 = vld [vmem:[%s3 + $0x390] sm:$0xff]
  %v384 = vld [vmem:[%s3 + $0x398] sm:$0xff]
  %v385 = vld [vmem:[%s3 + $0x3a0] sm:$0xff]
  %v386 = vld [vmem:[%s3 + $0x3a8] sm:$0xff]
  %v387 = vld [vmem:[%s3 + $0x3b0] sm:$0xff]
  %v388 = vld [vmem:[%s3 + $0x3b8] sm:$0xff]
  %v389 = vld [vmem:[%s3 + $0x3c0] sm:$0xff]
  %v390 = vld [vmem:[%s3 + $0x3c8] sm:$0xff]
  %v391 = vld [vmem:[%s3 + $0x3d0] sm:$0xff]
  %v392 = vld [vmem:[%s3 + $0x3d8] sm:$0xff]
  %v393 = vld [vmem:[%s3 + $0x3e0] sm:$0xff]
  %v394 = vld [vmem:[%s4] sm:$0x1]
  %v396 = vperm.slane %v394, 0
  %vm398 = vcmask 850944
  %v400 = vsel %vm398, %v260, 0
  %v403 = vsel %vm398, %v268, 0
  %405 = vmatpush.msra.mxu0 %v284
  %406 = vmatpush.msra.mxu0 %v283
  %407 = vmatpush.msra.mxu0 %v282
  %408 = vmatpush.msra.mxu0 %v281
  %409 = vmatpush.msra.mxu0 %v280
  %410 = vmatpush.msra.mxu0 %v279
  %411 = vmatpush.msra.mxu0 %v278
  %412 = vmatpush.msra.mxu0 %v277
  %413 = vmatpush.msra.mxu0 %v276
  %414 = vmatpush.msra.mxu0 %v275
  %415 = vmatpush.msra.mxu0 %v274
  %416 = vmatpush.msra.mxu0 %v273
  %417 = vmatpush.msra.mxu0 %v272
  %418 = vmatpush.msra.mxu0 %v271
  %419 = vmatpush.msra.mxu0 %v270
  %420 = vmatpush.msra.mxu0 %v269
  %421 = vmatmul.f32.gmra.mxu0 %v253
  %v422 = vpop.f32.mrf.mxu0
  %v423 = vadd.f32 %v396, %v422
  %424 = vmatmul.f32.gmra.mxu0 %v261
  %v425 = vpop.f32.mrf.mxu0
  %v426 = vadd.f32 %v396, %v425
  %427 = vdwg.mxu0
  %428 = vmatpush.msra.mxu0 %v300
  %429 = vmatpush.msra.mxu0 %v299
  %430 = vmatpush.msra.mxu0 %v298
  %431 = vmatpush.msra.mxu0 %v297
  %432 = vmatpush.msra.mxu0 %v296
  %433 = vmatpush.msra.mxu0 %v295
  %434 = vmatpush.msra.mxu0 %v294
  %435 = vmatpush.msra.mxu0 %v293
  %436 = vmatpush.msra.mxu0 %v292
  %437 = vmatpush.msra.mxu0 %v291
  %438 = vmatpush.msra.mxu0 %v290
  %439 = vmatpush.msra.mxu0 %v289
  %440 = vmatpush.msra.mxu0 %v288
  %441 = vmatpush.msra.mxu0 %v287
  %442 = vmatpush.msra.mxu0 %v286
  %443 = vmatpush.msra.mxu0 %v285
  %444 = vmatmul.f32.gmra.mxu0 %v254
  %v445 = vpop.f32.mrf.mxu0
  %v446 = vadd.f32 %v423, %v445
  %447 = vmatmul.f32.gmra.mxu0 %v262
  %v448 = vpop.f32.mrf.mxu0
  %v449 = vadd.f32 %v426, %v448
  %450 = vdwg.mxu0
  %451 = vmatpush.msra.mxu0 %v316
  %452 = vmatpush.msra.mxu0 %v315
  %453 = vmatpush.msra.mxu0 %v314
  %454 = vmatpush.msra.mxu0 %v313
  %455 = vmatpush.msra.mxu0 %v312
  %456 = vmatpush.msra.mxu0 %v311
  %457 = vmatpush.msra.mxu0 %v310
  %458 = vmatpush.msra.mxu0 %v309
  %459 = vmatpush.msra.mxu0 %v308
  %460 = vmatpush.msra.mxu0 %v307
  %461 = vmatpush.msra.mxu0 %v306
  %462 = vmatpush.msra.mxu0 %v305
  %463 = vmatpush.msra.mxu0 %v304
  %464 = vmatpush.msra.mxu0 %v303
  %465 = vmatpush.msra.mxu0 %v302
  %466 = vmatpush.msra.mxu0 %v301
  %467 = vmatmul.f32.gmra.mxu0 %v255
  %v468 = vpop.f32.mrf.mxu0
  %v469 = vadd.f32 %v446, %v468
  %470 = vmatmul.f32.gmra.mxu0 %v263
  %v471 = vpop.f32.mrf.mxu0
  %v472 = vadd.f32 %v449, %v471
  %473 = vdwg.mxu0
  %474 = vmatpush.msra.mxu0 %v332
  %475 = vmatpush.msra.mxu0 %v331
  %476 = vmatpush.msra.mxu0 %v330
  %477 = vmatpush.msra.mxu0 %v329
  %478 = vmatpush.msra.mxu0 %v328
  %479 = vmatpush.msra.mxu0 %v327
  %480 = vmatpush.msra.mxu0 %v326
  %481 = vmatpush.msra.mxu0 %v325
  %482 = vmatpush.msra.mxu0 %v324
  %483 = vmatpush.msra.mxu0 %v323
  %484 = vmatpush.msra.mxu0 %v322
  %485 = vmatpush.msra.mxu0 %v321
  %486 = vmatpush.msra.mxu0 %v320
  %487 = vmatpush.msra.mxu0 %v319
  %488 = vmatpush.msra.mxu0 %v318
  %489 = vmatpush.msra.mxu0 %v317
  %490 = vmatmul.f32.gmra.mxu0 %v256
  %v491 = vpop.f32.mrf.mxu0
  %v492 = vadd.f32 %v469, %v491
  %493 = vmatmul.f32.gmra.mxu0 %v264
  %v494 = vpop.f32.mrf.mxu0
  %v495 = vadd.f32 %v472, %v494
  %496 = vdwg.mxu0
  %497 = vmatpush.msra.mxu0 %v348
  %498 = vmatpush.msra.mxu0 %v347
  %499 = vmatpush.msra.mxu0 %v346
  %500 = vmatpush.msra.mxu0 %v345
  %501 = vmatpush.msra.mxu0 %v344
  %502 = vmatpush.msra.mxu0 %v343
  %503 = vmatpush.msra.mxu0 %v342
  %504 = vmatpush.msra.mxu0 %v341
  %505 = vmatpush.msra.mxu0 %v340
  %506 = vmatpush.msra.mxu0 %v339
  %507 = vmatpush.msra.mxu0 %v338
  %508 = vmatpush.msra.mxu0 %v337
  %509 = vmatpush.msra.mxu0 %v336
  %510 = vmatpush.msra.mxu0 %v335
  %511 = vmatpush.msra.mxu0 %v334
  %512 = vmatpush.msra.mxu0 %v333
  %513 = vmatmul.f32.gmra.mxu0 %v257
  %v514 = vpop.f32.mrf.mxu0
  %v515 = vadd.f32 %v492, %v514
  %516 = vmatmul.f32.gmra.mxu0 %v265
  %v517 = vpop.f32.mrf.mxu0
  %v518 = vadd.f32 %v495, %v517
  %519 = vdwg.mxu0
  %520 = vmatpush.msra.mxu0 %v364
  %521 = vmatpush.msra.mxu0 %v363
  %522 = vmatpush.msra.mxu0 %v362
  %523 = vmatpush.msra.mxu0 %v361
  %524 = vmatpush.msra.mxu0 %v360
  %525 = vmatpush.msra.mxu0 %v359
  %526 = vmatpush.msra.mxu0 %v358
  %527 = vmatpush.msra.mxu0 %v357
  %528 = vmatpush.msra.mxu0 %v356
  %529 = vmatpush.msra.mxu0 %v355
  %530 = vmatpush.msra.mxu0 %v354
  %531 = vmatpush.msra.mxu0 %v353
  %532 = vmatpush.msra.mxu0 %v352
  %533 = vmatpush.msra.mxu0 %v351
  %534 = vmatpush.msra.mxu0 %v350
  %535 = vmatpush.msra.mxu0 %v349
  %536 = vmatmul.f32.gmra.mxu0 %v258
  %v537 = vpop.f32.mrf.mxu0
  %v538 = vadd.f32 %v515, %v537
  %539 = vmatmul.f32.gmra.mxu0 %v266
  %v540 = vpop.f32.mrf.mxu0
  %v541 = vadd.f32 %v518, %v540
  %542 = vdwg.mxu0
  %543 = vmatpush.msra.mxu0 %v380
  %544 = vmatpush.msra.mxu0 %v379
  %545 = vmatpush.msra.mxu0 %v378
  %546 = vmatpush.msra.mxu0 %v377
  %547 = vmatpush.msra.mxu0 %v376
  %548 = vmatpush.msra.mxu0 %v375
  %549 = vmatpush.msra.mxu0 %v374
  %550 = vmatpush.msra.mxu0 %v373
  %551 = vmatpush.msra.mxu0 %v372
  %552 = vmatpush.msra.mxu0 %v371
  %553 = vmatpush.msra.mxu0 %v370
  %554 = vmatpush.msra.mxu0 %v369
  %555 = vmatpush.msra.mxu0 %v368
  %556 = vmatpush.msra.mxu0 %v367
  %557 = vmatpush.msra.mxu0 %v366
  %558 = vmatpush.msra.mxu0 %v365
  %559 = vmatmul.f32.gmra.mxu0 %v259
  %v560 = vpop.f32.mrf.mxu0
  %v561 = vadd.f32 %v538, %v560
  %562 = vmatmul.f32.gmra.mxu0 %v267
  %v563 = vpop.f32.mrf.mxu0
  %v564 = vadd.f32 %v541, %v563
  %565 = vdwg.mxu0
  %566 = vmatpush.msra.mxu0 0.0
  %567 = vmatpush.msra.mxu0 0.0
  %568 = vmatpush.msra.mxu0 0.0
  %569 = vmatpush.msra.mxu0 %v393
  %570 = vmatpush.msra.mxu0 %v392
  %571 = vmatpush.msra.mxu0 %v391
  %572 = vmatpush.msra.mxu0 %v390
  %573 = vmatpush.msra.mxu0 %v389
  %574 = vmatpush.msra.mxu0 %v388
  %575 = vmatpush.msra.mxu0 %v387
  %576 = vmatpush.msra.mxu0 %v386
  %577 = vmatpush.msra.mxu0 %v385
  %578 = vmatpush.msra.mxu0 %v384
  %579 = vmatpush.msra.mxu0 %v383
  %580 = vmatpush.msra.mxu0 %v382
  %581 = vmatpush.msra.mxu0 %v381
  %582 = vmatmul.f32.gmra.mxu0 %v400
  %v583 = vpop.f32.mrf.mxu0
  %v584 = vadd.f32 %v561, %v583
  %585 = vmatmul.f32.gmra.mxu0 %v403
  %v586 = vpop.f32.mrf.mxu0
  %v587 = vadd.f32 %v564, %v586
  %588 = vdwg.mxu0
  %v589 = vadd.f32 %v26, %v584
  %v590 = vadd.f32 %v27, %v587
  %v591 = vld [vmem:[%s5] sm:$0x1]
  %v592 = vld [vmem:[%s6] sm:$0x1]
  %v593 = vsel %vm62, %v589, 0.0
  %594 = vadd.xlane.f32.xlu0 %v593
  %v595 = vpop.xlane.xlu0 %594
  %v596 = vsel %vm62, %v590, 0.0
  %597 = vadd.xlane.f32.xlu0 %v596
  %v598 = vpop.xlane.xlu0 %597
  %v599 = vrcp.pop 16.0
  %v600 = vmul.f32 16.0, %v599
  %v601 = vsub.f32 1.0, %v600
  %v602 = vmul.f32 %v599, %v601
  %v603 = vadd.f32 %v599, %v602
  %vm604 = vweird.f32 %v599
  %v605 = vsel %vm604, %v599, %v603
  %v606 = vmul.f32 %v595, %v605
  %v607 = vmul.f32 %v598, %v605
  %v608 = vsub.f32 %v589, %v606
  %v609 = vsub.f32 %v590, %v607
  %v610 = vmul.f32 %v608, %v608
  %v611 = vmul.f32 %v609, %v609
  %v612 = vsel %vm62, %v610, 0.0
  %613 = vadd.xlane.f32.xlu0 %v612
  %v614 = vpop.xlane.xlu0 %613
  %v615 = vsel %vm62, %v611, 0.0
  %616 = vadd.xlane.f32.xlu0 %v615
  %v617 = vpop.xlane.xlu0 %616
  %v618 = vmul.f32 %v614, %v605
  %v619 = vmul.f32 %v617, %v605
  %v620 = vadd.f32 %v618, 1e-05
  %v621 = vadd.f32 %v619, 1e-05
  %v622 = vrsqrt.pop %v620
  %v623 = vmul.f32 %v622, %v620
  %v624 = vmul.f32 %v623, %v622
  %v625 = vmul.f32 0.5, %v624
  %v626 = vsub.f32 1.5, %v625
  %v627 = vmul.f32 %v622, %v626
  %vm628 = vweird.f32 %v620
  %vm629 = vweird.f32 %v622
  %vm630 = vmor %vm628, %vm629
  %v631 = vsel %vm630, %v622, %v627
  %v632 = vrsqrt.pop %v621
  %v633 = vmul.f32 %v632, %v621
  %v634 = vmul.f32 %v633, %v632
  %v635 = vmul.f32 0.5, %v634
  %v636 = vsub.f32 1.5, %v635
  %v637 = vmul.f32 %v632, %v636
  %vm638 = vweird.f32 %v621
  %vm639 = vweird.f32 %v632
  %vm640 = vmor %vm638, %vm639
  %v641 = vsel %vm640, %v632, %v637
  %v642 = vmul.f32 %v608, %v631
  %v643 = vmul.f32 %v609, %v641
  %v645 = vperm.slane %v591, 0
  %v647 = vmul.f32 %v642, %v645
  %v648 = vmul.f32 %v643, %v645
  %v650 = vperm.slane %v592, 0
  %v652 = vadd.f32 %v647, %v650
  %v653 = vadd.f32 %v648, %v650
  %654 = vst.msk [vmem:[%s7] sm:$0xff] %vm62, %v652
  %655 = vst.msk [vmem:[%s7 + $0x8] sm:$0xff] %vm62, %v653
  // Predicated region
  $region30: #{transformer_prediction_forward.14} parent=0 // pred_check
    _
  $region31: #{transformer_prediction_forward.14} parent=0 // pred_check_branch
    %657 = sbr.rel (0) target = $region33
  $region32: #{transformer_prediction_forward.14} parent=0 // pred_region
    _
  $region33: #{transformer_prediction_forward.14} parent=0 // pred_fallthru
    _
  // Predicated region
  $region34: #{transformer_prediction_forward.14} parent=0 // pred_check
    _
  $region35: #{transformer_prediction_forward.14} parent=0 // pred_check_branch
    %659 = sbr.rel (0) target = $region37
  $region36: #{transformer_prediction_forward.14} parent=0 // pred_region
    _
  $region37: #{transformer_prediction_forward.14} parent=0 // pred_fallthru
    _

</llo_original>
